<compile_context>
chip_gen: v6e
topology: v6e:2x2x1
jax: 0.10.0
libtpu: 0.0.40
codegen_flags: <defaults>
</compile_context>

<pallas_src>
import math
from functools import partial

import numpy as np
import jax
import jax.numpy as jnp
from jax import lax
from jax.experimental import pallas as pl
from jax.experimental.pallas import tpu as pltpu

LN_EPS = 1e-5                 # PyTorch nn.LayerNorm default
MM_DTYPE = jnp.bfloat16       # MXU operand dtype (f32 accumulation everywhere)


# ----------------------------- math helpers (pure jnp) -------------------------

def _mm(a, b):
    """2-D matmul: bf16 operands, f32 accumulation (MXU-native path)."""
    return jnp.dot(a.astype(MM_DTYPE), b.astype(MM_DTYPE),
                   preferred_element_type=jnp.float32)


def _bmm(eq, a, b):
    """Batched einsum (single leading batch dim): bf16 operands, f32 acc."""
    return jnp.einsum(eq, a.astype(MM_DTYPE), b.astype(MM_DTYPE),
                      preferred_element_type=jnp.float32)


def _layernorm(x, g, b):
    mu = jnp.mean(x, axis=-1, keepdims=True)
    var = jnp.mean(jnp.square(x - mu), axis=-1, keepdims=True)
    return (x - mu) * lax.rsqrt(var + LN_EPS) * g + b


def _gelu_exact(x):
    # exact (erf) GELU, matching torch.nn.GELU() default
    return 0.5 * x * (1.0 + lax.erf(x * (1.0 / math.sqrt(2.0))))


def _mha_all_heads(xq, xk, xv, wq, bq, wk, bk, wv, bv, wo, bo,
                   *, batch, n_heads, head_dim, approx_recip):
    """Multi-head attention for all heads / all batch elements at once.

    xq: (B*Nq, C) queries; xk/xv: (B*Nk, C) keys/values.  Heads never leave the
    lane axis: per-head score / value contractions use block-diagonal
    (head-masked) K and V so there is no per-head loop, lane slicing or concat.
    """
    C = n_heads * head_dim
    Nq = xq.shape[0] // batch
    Nk = xk.shape[0] // batch
    M = n_heads * Nk                    # flattened (head, key) axis
    scale = head_dim ** -0.5

    # Projections: full (B*N, C) x (C, C) matmuls; weights pre-split in wrapper.
    q = (_mm(xq, wq) + bq) * scale      # fold 1/sqrt(hd) into q once
    k = _mm(xk, wk) + bk
    v = _mm(xv, wv) + bv

    # Head mask built directly at broadcastable shape (1, H, 1, C).
    h_idx = lax.broadcasted_iota(jnp.int32, (1, n_heads, 1, C), 1)
    c_idx = lax.broadcasted_iota(jnp.int32, (1, n_heads, 1, C), 3)
    head_mask = jnp.logical_and(c_idx >= h_idx * head_dim,
                                c_idx < (h_idx + 1) * head_dim
                                ).astype(jnp.float32)

    # Block-diagonal K / V: (B, M, C); row (h*Nk + t) == K[t] masked to head h.
    k_exp = (k.reshape(batch, 1, Nk, C) * head_mask).reshape(batch, M, C)
    v_exp = (v.reshape(batch, 1, Nk, C) * head_mask).reshape(batch, M, C)

    # All-head scores in one batched matmul: column (h*Nk + t) = q_h . k_h[t].
    q3 = q.reshape(batch, Nq, C)
    s = _bmm('bqc,bmc->bqm', q3, k_exp)                       # (B, Nq, M) f32

    # Softmax per (b, q, head).  Shift by the global row max (shift-invariant);
    # per-head denominators via a 0/1 segment matmul (stays in the M-lane layout).
    s = s - jnp.max(s, axis=-1, keepdims=True)
    p = jnp.exp(s).reshape(batch * Nq, M)                     # f32

    m_idx = lax.broadcasted_iota(jnp.int32, (M, n_heads), 0)
    h2_idx = lax.broadcasted_iota(jnp.int32, (M, n_heads), 1)
    seg = jnp.logical_and(m_idx >= h2_idx * Nk,
                          m_idx < (h2_idx + 1) * Nk).astype(jnp.float32)   # (M,H)
    m_t = lax.broadcasted_iota(jnp.int32, (n_heads, M), 1)
    h_t = lax.broadcasted_iota(jnp.int32, (n_heads, M), 0)
    seg_t = jnp.logical_and(m_t >= h_t * Nk,
                            m_t < (h_t + 1) * Nk).astype(jnp.float32)      # (H,M)

    denom = jnp.dot(p, seg, preferred_element_type=jnp.float32)   # (B*Nq, H)
    if approx_recip:
        inv = pl.reciprocal(denom, approx=True)                   # EUP slot
    else:
        inv = 1.0 / denom
    inv_m = jnp.dot(inv, seg_t, preferred_element_type=jnp.float32)   # (B*Nq, M)
    p_norm = (p * inv_m).reshape(batch, Nq, M)

    # Attention output for all heads, already in concatenated-head layout.
    o = _bmm('bqm,bmc->bqc', p_norm, v_exp).reshape(batch * Nq, C)
    return _mm(o, wo) + bo


def _forward_core(vis, txt,
                  cwq, cbq, cwk, cbk, cwv, cbv, cwo, cbo,
                  swq, sbq, swk, sbk, swv, sbv, swo, sbo,
                  w1, b1, w2, b2,
                  g1, be1, g2, be2, g3, be3,
                  *, batch, n_heads, head_dim, approx_recip):
    """vis: (B*Nv, C), txt: (B*Nt, C) -> (B*Nv, C).  Used by kernel and ref."""
    ca = _mha_all_heads(vis, txt, txt, cwq, cbq, cwk, cbk, cwv, cbv, cwo, cbo,
                        batch=batch, n_heads=n_heads, head_dim=head_dim,
                        approx_recip=approx_recip)
    fused = _layernorm(vis + ca, g1, be1)

    sa = _mha_all_heads(fused, fused, fused, swq, sbq, swk, sbk, swv, sbv, swo, sbo,
                        batch=batch, n_heads=n_heads, head_dim=head_dim,
                        approx_recip=approx_recip)
    fused = _layernorm(fused + sa, g2, be2)

    h = _gelu_exact(_mm(fused, w1) + b1)         # dropout = identity (eval)
    ff = _mm(h, w2) + b2
    return _layernorm(fused + ff, g3, be3)


# ------------------------------- Pallas kernel ---------------------------------

def fusion_kernel(*refs, batch, n_heads, head_dim):
    out_ref = refs[-1]
    vals = [r[...] for r in refs[:-1]]
    out = _forward_core(*vals, batch=batch, n_heads=n_heads, head_dim=head_dim,
                        approx_recip=True)
    out_ref[...] = out.astype(out_ref.dtype)


def _prepare_inputs(visual, textual, params):
    """Wrapper-side layout prep: flatten batch, split QKV weights per head-role,
    make biases / LN params sublane-broadcastable (1, X).  All free XLA ops."""
    B, Nv, C = visual.shape
    _, Nt, _ = textual.shape
    (c_qkv_w, c_qkv_b, c_proj_w, c_proj_b,
     s_qkv_w, s_qkv_b, s_proj_w, s_proj_b,
     w1, b1, w2, b2,
     g1, be1, g2, be2, g3, be3) = params

    def row(x):
        return x.reshape(1, -1)

    def split_qkv(w, b):
        # w: (C, 3C) in (in, out) layout; b: (3C,)
        return (w[:, 0 * C:1 * C], row(b[0 * C:1 * C]),
                w[:, 1 * C:2 * C], row(b[1 * C:2 * C]),
                w[:, 2 * C:3 * C], row(b[2 * C:3 * C]))

    return (visual.reshape(B * Nv, C), textual.reshape(B * Nt, C),
            *split_qkv(c_qkv_w, c_qkv_b), c_proj_w, row(c_proj_b),
            *split_qkv(s_qkv_w, s_qkv_b), s_proj_w, row(s_proj_b),
            w1, row(b1), w2, row(b2),
            row(g1), row(be1), row(g2), row(be2), row(g3), row(be3))


def multimodal_fusion(visual, textual, params, *, n_heads):
    """visual: (B, Nv, C), textual: (B, Nt, C) -> (B, Nv, C)."""
    B, Nv, C = visual.shape
    head_dim = C // n_heads
    args = _prepare_inputs(visual, textual, params)

    out2 = pl.pallas_call(
        partial(fusion_kernel, batch=B, n_heads=n_heads, head_dim=head_dim),
        out_shape=jax.ShapeDtypeStruct((B * Nv, C), visual.dtype),
        # Single invocation, whole arrays resident in VMEM (no grid -> no
        # per-step pipeline overhead, no double-buffering of the weights).
        in_specs=[pl.BlockSpec(memory_space=pltpu.MemorySpace.VMEM)] * len(args),
        out_specs=pl.BlockSpec(memory_space=pltpu.MemorySpace.VMEM),
    )(*args)
    return out2.reshape(B, Nv, C)


# ------------------------------ parameter init ----------------------------------

def init_params(key, dim):
    ks = jax.random.split(key, 18)
    w = lambda k, i, o: jax.random.normal(k, (i, o), jnp.float32) * 0.02
    b = lambda k, o: jax.random.normal(k, (o,), jnp.float32) * 0.02
    return (
        # cross-attention: qkv (C, 3C) + bias, proj (C, C) + bias  ((in, out) layout)
        w(ks[0], dim, 3 * dim), b(ks[1], 3 * dim),
        w(ks[2], dim, dim),     b(ks[3], dim),
        # self-attention
        w(ks[4], dim, 3 * dim), b(ks[5], 3 * dim),
        w(ks[6], dim, dim),     b(ks[7], dim),
        # ffn
        w(ks[8], dim, 4 * dim),  b(ks[9], 4 * dim),
        w(ks[10], 4 * dim, dim), b(ks[11], dim),
        # layernorm 1..3 (gamma, beta)
        1.0 + b(ks[12], dim), b(ks[13], dim),
        1.0 + b(ks[14], dim), b(ks[15], dim),
        1.0 + b(ks[16], dim), b(ks[17], dim),
    )


# ------------------------------ references --------------------------------------

def jax_reference_same_math(visual, textual, params, *, n_heads):
    """Pure-JAX run of the exact kernel math (validates the Pallas lowering)."""
    B, Nv, C = visual.shape
    args = _prepare_inputs(visual, textual, params)
    out = _forward_core(*args, batch=B, n_heads=n_heads, head_dim=C // n_heads,
                        approx_recip=False)
    return out.reshape(B, Nv, C)


def torch_reference(visual, textual, params, *, n_heads):
    """Straightforward float32 re-implementation of the PyTorch module (eval)."""
    P = lax.Precision.HIGHEST
    (c_qkv_w, c_qkv_b, c_proj_w, c_proj_b,
     s_qkv_w, s_qkv_b, s_proj_w, s_proj_b,
     w1, b1, w2, b2, g1, be1, g2, be2, g3, be3) = params
    C = visual.shape[-1]
    hd = C // n_heads

    def linear(x, w, b):
        return jnp.dot(x, w, precision=P) + b

    def mha(xq, xk, xv, qkv_w, qkv_b, proj_w, proj_b):
        B, Nq, _ = xq.shape
        Nk = xk.shape[1]
        q = linear(xq, qkv_w[:, :C], qkv_b[:C])
        k = linear(xk, qkv_w[:, C:2 * C], qkv_b[C:2 * C])
        v = linear(xv, qkv_w[:, 2 * C:], qkv_b[2 * C:])
        q = q.reshape(B, Nq, n_heads, hd).transpose(0, 2, 1, 3)
        k = k.reshape(B, Nk, n_heads, hd).transpose(0, 2, 1, 3)
        v = v.reshape(B, Nk, n_heads, hd).transpose(0, 2, 1, 3)
        attn = jnp.einsum('bhqd,bhkd->bhqk', q, k, precision=P) * (hd ** -0.5)
        attn = jax.nn.softmax(attn, axis=-1)
        o = jnp.einsum('bhqk,bhkd->bhqd', attn, v, precision=P)
        o = o.transpose(0, 2, 1, 3).reshape(B, Nq, C)
        return linear(o, proj_w, proj_b)

    def ln(x, g, b):
        mu = jnp.mean(x, -1, keepdims=True)
        var = jnp.mean(jnp.square(x - mu), -1, keepdims=True)
        return (x - mu) / jnp.sqrt(var + LN_EPS) * g + b

    fused = ln(visual + mha(visual, textual, textual,
                            c_qkv_w, c_qkv_b, c_proj_w, c_proj_b), g1, be1)
    fused = ln(fused + mha(fused, fused, fused,
                           s_qkv_w, s_qkv_b, s_proj_w, s_proj_b), g2, be2)
    h = _gelu_exact(linear(fused, w1, b1))
    fused = ln(fused + linear(h, w2, b2), g3, be3)
    return fused


# ------------------------------------ main ---------------------------------------

if __name__ == "__main__":
    dim, n_heads = 32, 4
    B, Nv, Nt = 2, 8, 16

    key = jax.random.PRNGKey(0)
    k_vis, k_txt, k_par = jax.random.split(key, 3)
    visual = jax.random.normal(k_vis, (B, Nv, dim), jnp.float32)
    textual = jax.random.normal(k_txt, (B, Nt, dim), jnp.float32)
    params = init_params(k_par, dim)

    out = multimodal_fusion(visual, textual, params, n_heads=n_heads)
    out = jax.block_until_ready(out)
    assert out.shape == (B, Nv, dim)

    # (1) Tight check vs a pure-JAX run of the same math (bf16 MXU operands,
    #     f32 accumulation): validates the Pallas lowering itself.
    ref_same = jax_reference_same_math(visual, textual, params, n_heads=n_heads)
    np.testing.assert_allclose(np.asarray(out), np.asarray(ref_same),
                               rtol=1e-3, atol=1e-3)

    # (2) Check vs a straightforward float32 re-implementation of the PyTorch
    #     module: validates the head-batched restructuring; tolerance covers the
    #     intentional bf16 matmul-operand rounding.
    ref_f32 = torch_reference(visual, textual, params, n_heads=n_heads)
    np.testing.assert_allclose(np.asarray(out), np.asarray(ref_f32),
                               rtol=5e-3, atol=5e-3)

    print("KERNEL_OK")
</pallas_src>

<mosaic_0001>
module attributes {stable_mosaic.version = 11 : i64} {
  func.func @fusion_kernel(%arg0: memref<16x32xf32, #tpu.memory_space<vmem>>, %arg1: memref<32x32xf32, #tpu.memory_space<vmem>>, %arg2: memref<32x32xf32, #tpu.memory_space<vmem>>, %arg3: memref<1x32xf32, #tpu.memory_space<vmem>>, %arg4: memref<32x32xf32, #tpu.memory_space<vmem>>, %arg5: memref<1x32xf32, #tpu.memory_space<vmem>>, %arg6: memref<32x32xf32, #tpu.memory_space<vmem>>, %arg7: memref<1x32xf32, #tpu.memory_space<vmem>>, %arg8: memref<32x32xf32, #tpu.memory_space<vmem>>, %arg9: memref<1x32xf32, #tpu.memory_space<vmem>>, %arg10: memref<32x32xf32, #tpu.memory_space<vmem>>, %arg11: memref<1x32xf32, #tpu.memory_space<vmem>>, %arg12: memref<32x32xf32, #tpu.memory_space<vmem>>, %arg13: memref<1x32xf32, #tpu.memory_space<vmem>>, %arg14: memref<32x32xf32, #tpu.memory_space<vmem>>, %arg15: memref<1x32xf32, #tpu.memory_space<vmem>>, %arg16: memref<32x32xf32, #tpu.memory_space<vmem>>, %arg17: memref<1x32xf32, #tpu.memory_space<vmem>>, %arg18: memref<32x128xf32, #tpu.memory_space<vmem>>, %arg19: memref<1x128xf32, #tpu.memory_space<vmem>>, %arg20: memref<128x32xf32, #tpu.memory_space<vmem>>, %arg21: memref<1x32xf32, #tpu.memory_space<vmem>>, %arg22: memref<1x32xf32, #tpu.memory_space<vmem>>, %arg23: memref<1x32xf32, #tpu.memory_space<vmem>>, %arg24: memref<1x32xf32, #tpu.memory_space<vmem>>, %arg25: memref<1x32xf32, #tpu.memory_space<vmem>>, %arg26: memref<1x32xf32, #tpu.memory_space<vmem>>, %arg27: memref<1x32xf32, #tpu.memory_space<vmem>>, %arg28: memref<16x32xf32, #tpu.memory_space<vmem>>) attributes {dimension_semantics = [], scalar_prefetch = 0 : i64, scratch_operands = 0 : i64, tpu.core_type = #tpu.core_type<tc>} {
    %c0 = arith.constant 0 : index
    %c0_0 = arith.constant 0 : index
    %0 = vector.load %arg0[%c0, %c0_0] : memref<16x32xf32, #tpu.memory_space<vmem>>, vector<16x32xf32>
    %c0_1 = arith.constant 0 : index
    %c0_2 = arith.constant 0 : index
    %1 = vector.load %arg1[%c0_1, %c0_2] : memref<32x32xf32, #tpu.memory_space<vmem>>, vector<32x32xf32>
    %c0_3 = arith.constant 0 : index
    %c0_4 = arith.constant 0 : index
    %2 = vector.load %arg2[%c0_3, %c0_4] : memref<32x32xf32, #tpu.memory_space<vmem>>, vector<32x32xf32>
    %c0_5 = arith.constant 0 : index
    %c0_6 = arith.constant 0 : index
    %3 = vector.load %arg3[%c0_5, %c0_6] : memref<1x32xf32, #tpu.memory_space<vmem>>, vector<1x32xf32>
    %c0_7 = arith.constant 0 : index
    %c0_8 = arith.constant 0 : index
    %4 = vector.load %arg4[%c0_7, %c0_8] : memref<32x32xf32, #tpu.memory_space<vmem>>, vector<32x32xf32>
    %c0_9 = arith.constant 0 : index
    %c0_10 = arith.constant 0 : index
    %5 = vector.load %arg5[%c0_9, %c0_10] : memref<1x32xf32, #tpu.memory_space<vmem>>, vector<1x32xf32>
    %c0_11 = arith.constant 0 : index
    %c0_12 = arith.constant 0 : index
    %6 = vector.load %arg6[%c0_11, %c0_12] : memref<32x32xf32, #tpu.memory_space<vmem>>, vector<32x32xf32>
    %c0_13 = arith.constant 0 : index
    %c0_14 = arith.constant 0 : index
    %7 = vector.load %arg7[%c0_13, %c0_14] : memref<1x32xf32, #tpu.memory_space<vmem>>, vector<1x32xf32>
    %c0_15 = arith.constant 0 : index
    %c0_16 = arith.constant 0 : index
    %8 = vector.load %arg8[%c0_15, %c0_16] : memref<32x32xf32, #tpu.memory_space<vmem>>, vector<32x32xf32>
    %c0_17 = arith.constant 0 : index
    %c0_18 = arith.constant 0 : index
    %9 = vector.load %arg9[%c0_17, %c0_18] : memref<1x32xf32, #tpu.memory_space<vmem>>, vector<1x32xf32>
    %c0_19 = arith.constant 0 : index
    %c0_20 = arith.constant 0 : index
    %10 = vector.load %arg10[%c0_19, %c0_20] : memref<32x32xf32, #tpu.memory_space<vmem>>, vector<32x32xf32>
    %c0_21 = arith.constant 0 : index
    %c0_22 = arith.constant 0 : index
    %11 = vector.load %arg11[%c0_21, %c0_22] : memref<1x32xf32, #tpu.memory_space<vmem>>, vector<1x32xf32>
    %c0_23 = arith.constant 0 : index
    %c0_24 = arith.constant 0 : index
    %12 = vector.load %arg12[%c0_23, %c0_24] : memref<32x32xf32, #tpu.memory_space<vmem>>, vector<32x32xf32>
    %c0_25 = arith.constant 0 : index
    %c0_26 = arith.constant 0 : index
    %13 = vector.load %arg13[%c0_25, %c0_26] : memref<1x32xf32, #tpu.memory_space<vmem>>, vector<1x32xf32>
    %c0_27 = arith.constant 0 : index
    %c0_28 = arith.constant 0 : index
    %14 = vector.load %arg14[%c0_27, %c0_28] : memref<32x32xf32, #tpu.memory_space<vmem>>, vector<32x32xf32>
    %c0_29 = arith.constant 0 : index
    %c0_30 = arith.constant 0 : index
    %15 = vector.load %arg15[%c0_29, %c0_30] : memref<1x32xf32, #tpu.memory_space<vmem>>, vector<1x32xf32>
    %c0_31 = arith.constant 0 : index
    %c0_32 = arith.constant 0 : index
    %16 = vector.load %arg16[%c0_31, %c0_32] : memref<32x32xf32, #tpu.memory_space<vmem>>, vector<32x32xf32>
    %c0_33 = arith.constant 0 : index
    %c0_34 = arith.constant 0 : index
    %17 = vector.load %arg17[%c0_33, %c0_34] : memref<1x32xf32, #tpu.memory_space<vmem>>, vector<1x32xf32>
    %c0_35 = arith.constant 0 : index
    %c0_36 = arith.constant 0 : index
    %18 = vector.load %arg18[%c0_35, %c0_36] : memref<32x128xf32, #tpu.memory_space<vmem>>, vector<32x128xf32>
    %c0_37 = arith.constant 0 : index
    %c0_38 = arith.constant 0 : index
    %19 = vector.load %arg19[%c0_37, %c0_38] : memref<1x128xf32, #tpu.memory_space<vmem>>, vector<1x128xf32>
    %c0_39 = arith.constant 0 : index
    %c0_40 = arith.constant 0 : index
    %20 = vector.load %arg20[%c0_39, %c0_40] : memref<128x32xf32, #tpu.memory_space<vmem>>, vector<128x32xf32>
    %c0_41 = arith.constant 0 : index
    %c0_42 = arith.constant 0 : index
    %21 = vector.load %arg21[%c0_41, %c0_42] : memref<1x32xf32, #tpu.memory_space<vmem>>, vector<1x32xf32>
    %c0_43 = arith.constant 0 : index
    %c0_44 = arith.constant 0 : index
    %22 = vector.load %arg22[%c0_43, %c0_44] : memref<1x32xf32, #tpu.memory_space<vmem>>, vector<1x32xf32>
    %c0_45 = arith.constant 0 : index
    %c0_46 = arith.constant 0 : index
    %23 = vector.load %arg23[%c0_45, %c0_46] : memref<1x32xf32, #tpu.memory_space<vmem>>, vector<1x32xf32>
    %c0_47 = arith.constant 0 : index
    %c0_48 = arith.constant 0 : index
    %24 = vector.load %arg24[%c0_47, %c0_48] : memref<1x32xf32, #tpu.memory_space<vmem>>, vector<1x32xf32>
    %c0_49 = arith.constant 0 : index
    %c0_50 = arith.constant 0 : index
    %25 = vector.load %arg25[%c0_49, %c0_50] : memref<1x32xf32, #tpu.memory_space<vmem>>, vector<1x32xf32>
    %c0_51 = arith.constant 0 : index
    %c0_52 = arith.constant 0 : index
    %26 = vector.load %arg26[%c0_51, %c0_52] : memref<1x32xf32, #tpu.memory_space<vmem>>, vector<1x32xf32>
    %c0_53 = arith.constant 0 : index
    %c0_54 = arith.constant 0 : index
    %27 = vector.load %arg27[%c0_53, %c0_54] : memref<1x32xf32, #tpu.memory_space<vmem>>, vector<1x32xf32>
    %28 = arith.truncf %0 : vector<16x32xf32> to vector<16x32xbf16>
    %29 = arith.truncf %2 : vector<32x32xf32> to vector<32x32xbf16>
    %cst = arith.constant dense<0.000000e+00> : vector<16x32xf32>
    %30 = tpu.matmul %28, %29, %cst {dimension_numbers = #tpu.dot_dimension_numbers<[1], [0], [0], [1], [0, 0, 1, 1], [], []>} : vector<16x32xbf16>, vector<32x32xbf16>, vector<16x32xf32> -> vector<16x32xf32>
    %31 = vector.broadcast %3 : vector<1x32xf32> to vector<16x32xf32>
    %32 = arith.addf %30, %31 : vector<16x32xf32>
    %cst_55 = arith.constant 0.353553385 : f32
    %33 = vector.broadcast %cst_55 : f32 to vector<16x32xf32>
    %34 = arith.mulf %32, %33 : vector<16x32xf32>
    %35 = arith.truncf %1 : vector<32x32xf32> to vector<32x32xbf16>
    %36 = arith.truncf %4 : vector<32x32xf32> to vector<32x32xbf16>
    %cst_56 = arith.constant dense<0.000000e+00> : vector<32x32xf32>
    %37 = tpu.matmul %35, %36, %cst_56 {dimension_numbers = #tpu.dot_dimension_numbers<[1], [0], [0], [1], [0, 0, 1, 1], [], []>} : vector<32x32xbf16>, vector<32x32xbf16>, vector<32x32xf32> -> vector<32x32xf32>
    %38 = vector.broadcast %5 : vector<1x32xf32> to vector<32x32xf32>
    %39 = arith.addf %37, %38 : vector<32x32xf32>
    %40 = arith.truncf %1 : vector<32x32xf32> to vector<32x32xbf16>
    %41 = arith.truncf %6 : vector<32x32xf32> to vector<32x32xbf16>
    %cst_57 = arith.constant dense<0.000000e+00> : vector<32x32xf32>
    %42 = tpu.matmul %40, %41, %cst_57 {dimension_numbers = #tpu.dot_dimension_numbers<[1], [0], [0], [1], [0, 0, 1, 1], [], []>} : vector<32x32xbf16>, vector<32x32xbf16>, vector<32x32xf32> -> vector<32x32xf32>
    %43 = vector.broadcast %7 : vector<1x32xf32> to vector<32x32xf32>
    %44 = arith.addf %42, %43 : vector<32x32xf32>
    %45 = tpu.iota {dimensions = array<i32: 1>} : vector<1x4x1x32xi32>
    %46 = tpu.iota {dimensions = array<i32: 3>} : vector<1x4x1x32xi32>
    %c8_i32 = arith.constant 8 : i32
    %47 = vector.broadcast %c8_i32 : i32 to vector<1x4x1x32xi32>
    %48 = arith.muli %45, %47 : vector<1x4x1x32xi32>
    %49 = arith.cmpi sge, %46, %48 : vector<1x4x1x32xi32>
    %c1_i32 = arith.constant 1 : i32
    %50 = vector.broadcast %c1_i32 : i32 to vector<1x4x1x32xi32>
    %51 = arith.addi %45, %50 : vector<1x4x1x32xi32>
    %c8_i32_58 = arith.constant 8 : i32
    %52 = vector.broadcast %c8_i32_58 : i32 to vector<1x4x1x32xi32>
    %53 = arith.muli %51, %52 : vector<1x4x1x32xi32>
    %54 = arith.cmpi slt, %46, %53 : vector<1x4x1x32xi32>
    %55 = arith.andi %49, %54 : vector<1x4x1x32xi1>
    %56 = arith.extui %55 : vector<1x4x1x32xi1> to vector<1x4x1x32xi32>
    %57 = arith.sitofp %56 : vector<1x4x1x32xi32> to vector<1x4x1x32xf32>
    %58 = vector.shape_cast %39 : vector<32x32xf32> to vector<2x1x16x32xf32>
    %59 = vector.broadcast %58 : vector<2x1x16x32xf32> to vector<2x4x16x32xf32>
    %60 = vector.broadcast %57 : vector<1x4x1x32xf32> to vector<2x4x16x32xf32>
    %61 = arith.mulf %59, %60 : vector<2x4x16x32xf32>
    %62 = vector.shape_cast %61 : vector<2x4x16x32xf32> to vector<2x64x32xf32>
    %63 = vector.shape_cast %44 : vector<32x32xf32> to vector<2x1x16x32xf32>
    %64 = vector.broadcast %63 : vector<2x1x16x32xf32> to vector<2x4x16x32xf32>
    %65 = vector.broadcast %57 : vector<1x4x1x32xf32> to vector<2x4x16x32xf32>
    %66 = arith.mulf %64, %65 : vector<2x4x16x32xf32>
    %67 = vector.shape_cast %66 : vector<2x4x16x32xf32> to vector<2x64x32xf32>
    %68 = vector.shape_cast %34 : vector<16x32xf32> to vector<2x8x32xf32>
    %69 = arith.truncf %68 : vector<2x8x32xf32> to vector<2x8x32xbf16>
    %70 = arith.truncf %62 : vector<2x64x32xf32> to vector<2x64x32xbf16>
    "tpu.trace_start"() <{level = 10 : i32, message = "bqc,bmc->bqm"}> : () -> ()
    %cst_59 = arith.constant dense<0.000000e+00> : vector<2x8x64xf32>
    %71 = tpu.matmul %69, %70, %cst_59 {dimension_numbers = #tpu.dot_dimension_numbers<[2], [2], [1], [1], [0, 0, 0, 1, 1, 1], [0], [0]>} : vector<2x8x32xbf16>, vector<2x64x32xbf16>, vector<2x8x64xf32> -> vector<2x8x64xf32>
    "tpu.trace_stop"() : () -> ()
    %cst_60 = arith.constant dense<0xFF800000> : vector<2x8xf32>
    %72 = vector.multi_reduction <maximumf>, %71, %cst_60 [2] : vector<2x8x64xf32> to vector<2x8xf32>
    %73 = vector.shape_cast %72 : vector<2x8xf32> to vector<2x8x1xf32>
    %74 = vector.broadcast %73 : vector<2x8x1xf32> to vector<2x8x64xf32>
    %75 = arith.subf %71, %74 : vector<2x8x64xf32>
    %76 = math.exp %75 : vector<2x8x64xf32>
    %77 = vector.shape_cast %76 : vector<2x8x64xf32> to vector<16x64xf32>
    %78 = tpu.iota {dimensions = array<i32: 0>} : vector<64x4xi32>
    %79 = tpu.iota {dimensions = array<i32: 1>} : vector<64x4xi32>
    %c16_i32 = arith.constant 16 : i32
    %80 = vector.broadcast %c16_i32 : i32 to vector<64x4xi32>
    %81 = arith.muli %79, %80 : vector<64x4xi32>
    %82 = arith.cmpi sge, %78, %81 : vector<64x4xi32>
    %c1_i32_61 = arith.constant 1 : i32
    %83 = vector.broadcast %c1_i32_61 : i32 to vector<64x4xi32>
    %84 = arith.addi %79, %83 : vector<64x4xi32>
    %c16_i32_62 = arith.constant 16 : i32
    %85 = vector.broadcast %c16_i32_62 : i32 to vector<64x4xi32>
    %86 = arith.muli %84, %85 : vector<64x4xi32>
    %87 = arith.cmpi slt, %78, %86 : vector<64x4xi32>
    %88 = arith.andi %82, %87 : vector<64x4xi1>
    %89 = arith.extui %88 : vector<64x4xi1> to vector<64x4xi32>
    %90 = arith.sitofp %89 : vector<64x4xi32> to vector<64x4xf32>
    %91 = tpu.iota {dimensions = array<i32: 1>} : vector<4x64xi32>
    %92 = tpu.iota {dimensions = array<i32: 0>} : vector<4x64xi32>
    %c16_i32_63 = arith.constant 16 : i32
    %93 = vector.broadcast %c16_i32_63 : i32 to vector<4x64xi32>
    %94 = arith.muli %92, %93 : vector<4x64xi32>
    %95 = arith.cmpi sge, %91, %94 : vector<4x64xi32>
    %c1_i32_64 = arith.constant 1 : i32
    %96 = vector.broadcast %c1_i32_64 : i32 to vector<4x64xi32>
    %97 = arith.addi %92, %96 : vector<4x64xi32>
    %c16_i32_65 = arith.constant 16 : i32
    %98 = vector.broadcast %c16_i32_65 : i32 to vector<4x64xi32>
    %99 = arith.muli %97, %98 : vector<4x64xi32>
    %100 = arith.cmpi slt, %91, %99 : vector<4x64xi32>
    %101 = arith.andi %95, %100 : vector<4x64xi1>
    %102 = arith.extui %101 : vector<4x64xi1> to vector<4x64xi32>
    %103 = arith.sitofp %102 : vector<4x64xi32> to vector<4x64xf32>
    %cst_66 = arith.constant dense<0.000000e+00> : vector<16x4xf32>
    %104 = tpu.matmul %77, %90, %cst_66 {dimension_numbers = #tpu.dot_dimension_numbers<[1], [0], [0], [1], [0, 0, 1, 1], [], []>} : vector<16x64xf32>, vector<64x4xf32>, vector<16x4xf32> -> vector<16x4xf32>
    %105 = tpu.reciprocal %104 {approx = true} : vector<16x4xf32> -> vector<16x4xf32>
    %cst_67 = arith.constant dense<0.000000e+00> : vector<16x64xf32>
    %106 = tpu.matmul %105, %103, %cst_67 {dimension_numbers = #tpu.dot_dimension_numbers<[1], [0], [0], [1], [0, 0, 1, 1], [], []>} : vector<16x4xf32>, vector<4x64xf32>, vector<16x64xf32> -> vector<16x64xf32>
    %107 = arith.mulf %77, %106 : vector<16x64xf32>
    %108 = vector.shape_cast %107 : vector<16x64xf32> to vector<2x8x64xf32>
    %109 = arith.truncf %108 : vector<2x8x64xf32> to vector<2x8x64xbf16>
    %110 = arith.truncf %67 : vector<2x64x32xf32> to vector<2x64x32xbf16>
    "tpu.trace_start"() <{level = 10 : i32, message = "bqm,bmc->bqc"}> : () -> ()
    %cst_68 = arith.constant dense<0.000000e+00> : vector<2x8x32xf32>
    %111 = tpu.matmul %109, %110, %cst_68 {dimension_numbers = #tpu.dot_dimension_numbers<[2], [1], [1], [2], [0, 0, 0, 1, 1, 2], [0], [0]>} : vector<2x8x64xbf16>, vector<2x64x32xbf16>, vector<2x8x32xf32> -> vector<2x8x32xf32>
    "tpu.trace_stop"() : () -> ()
    %112 = vector.shape_cast %111 : vector<2x8x32xf32> to vector<16x32xf32>
    %113 = arith.truncf %112 : vector<16x32xf32> to vector<16x32xbf16>
    %114 = arith.truncf %8 : vector<32x32xf32> to vector<32x32xbf16>
    %cst_69 = arith.constant dense<0.000000e+00> : vector<16x32xf32>
    %115 = tpu.matmul %113, %114, %cst_69 {dimension_numbers = #tpu.dot_dimension_numbers<[1], [0], [0], [1], [0, 0, 1, 1], [], []>} : vector<16x32xbf16>, vector<32x32xbf16>, vector<16x32xf32> -> vector<16x32xf32>
    %116 = vector.broadcast %9 : vector<1x32xf32> to vector<16x32xf32>
    %117 = arith.addf %115, %116 : vector<16x32xf32>
    %118 = arith.addf %0, %117 : vector<16x32xf32>
    %cst_70 = arith.constant dense<0.000000e+00> : vector<16xf32>
    %119 = vector.multi_reduction <add>, %118, %cst_70 [1] : vector<16x32xf32> to vector<16xf32>
    %120 = vector.shape_cast %119 : vector<16xf32> to vector<16x1xf32>
    %cst_71 = arith.constant 3.200000e+01 : f32
    %121 = vector.broadcast %cst_71 : f32 to vector<16x1xf32>
    %122 = arith.divf %120, %121 : vector<16x1xf32>
    %123 = vector.broadcast %122 : vector<16x1xf32> to vector<16x32xf32>
    %124 = arith.subf %118, %123 : vector<16x32xf32>
    %125 = arith.mulf %124, %124 : vector<16x32xf32>
    %cst_72 = arith.constant dense<0.000000e+00> : vector<16xf32>
    %126 = vector.multi_reduction <add>, %125, %cst_72 [1] : vector<16x32xf32> to vector<16xf32>
    %127 = vector.shape_cast %126 : vector<16xf32> to vector<16x1xf32>
    %cst_73 = arith.constant 3.200000e+01 : f32
    %128 = vector.broadcast %cst_73 : f32 to vector<16x1xf32>
    %129 = arith.divf %127, %128 : vector<16x1xf32>
    %130 = vector.broadcast %122 : vector<16x1xf32> to vector<16x32xf32>
    %131 = arith.subf %118, %130 : vector<16x32xf32>
    %cst_74 = arith.constant 9.99999974E-6 : f32
    %132 = vector.broadcast %cst_74 : f32 to vector<16x1xf32>
    %133 = arith.addf %129, %132 : vector<16x1xf32>
    %134 = math.rsqrt %133 : vector<16x1xf32>
    %135 = vector.broadcast %134 : vector<16x1xf32> to vector<16x32xf32>
    %136 = arith.mulf %131, %135 : vector<16x32xf32>
    %137 = vector.broadcast %22 : vector<1x32xf32> to vector<16x32xf32>
    %138 = arith.mulf %136, %137 : vector<16x32xf32>
    %139 = vector.broadcast %23 : vector<1x32xf32> to vector<16x32xf32>
    %140 = arith.addf %138, %139 : vector<16x32xf32>
    %141 = arith.truncf %140 : vector<16x32xf32> to vector<16x32xbf16>
    %142 = arith.truncf %10 : vector<32x32xf32> to vector<32x32xbf16>
    %cst_75 = arith.constant dense<0.000000e+00> : vector<16x32xf32>
    %143 = tpu.matmul %141, %142, %cst_75 {dimension_numbers = #tpu.dot_dimension_numbers<[1], [0], [0], [1], [0, 0, 1, 1], [], []>} : vector<16x32xbf16>, vector<32x32xbf16>, vector<16x32xf32> -> vector<16x32xf32>
    %144 = vector.broadcast %11 : vector<1x32xf32> to vector<16x32xf32>
    %145 = arith.addf %143, %144 : vector<16x32xf32>
    %cst_76 = arith.constant 0.353553385 : f32
    %146 = vector.broadcast %cst_76 : f32 to vector<16x32xf32>
    %147 = arith.mulf %145, %146 : vector<16x32xf32>
    %148 = arith.truncf %140 : vector<16x32xf32> to vector<16x32xbf16>
    %149 = arith.truncf %12 : vector<32x32xf32> to vector<32x32xbf16>
    %cst_77 = arith.constant dense<0.000000e+00> : vector<16x32xf32>
    %150 = tpu.matmul %148, %149, %cst_77 {dimension_numbers = #tpu.dot_dimension_numbers<[1], [0], [0], [1], [0, 0, 1, 1], [], []>} : vector<16x32xbf16>, vector<32x32xbf16>, vector<16x32xf32> -> vector<16x32xf32>
    %151 = vector.broadcast %13 : vector<1x32xf32> to vector<16x32xf32>
    %152 = arith.addf %150, %151 : vector<16x32xf32>
    %153 = arith.truncf %140 : vector<16x32xf32> to vector<16x32xbf16>
    %154 = arith.truncf %14 : vector<32x32xf32> to vector<32x32xbf16>
    %cst_78 = arith.constant dense<0.000000e+00> : vector<16x32xf32>
    %155 = tpu.matmul %153, %154, %cst_78 {dimension_numbers = #tpu.dot_dimension_numbers<[1], [0], [0], [1], [0, 0, 1, 1], [], []>} : vector<16x32xbf16>, vector<32x32xbf16>, vector<16x32xf32> -> vector<16x32xf32>
    %156 = vector.broadcast %15 : vector<1x32xf32> to vector<16x32xf32>
    %157 = arith.addf %155, %156 : vector<16x32xf32>
    %158 = tpu.iota {dimensions = array<i32: 1>} : vector<1x4x1x32xi32>
    %159 = tpu.iota {dimensions = array<i32: 3>} : vector<1x4x1x32xi32>
    %c8_i32_79 = arith.constant 8 : i32
    %160 = vector.broadcast %c8_i32_79 : i32 to vector<1x4x1x32xi32>
    %161 = arith.muli %158, %160 : vector<1x4x1x32xi32>
    %162 = arith.cmpi sge, %159, %161 : vector<1x4x1x32xi32>
    %c1_i32_80 = arith.constant 1 : i32
    %163 = vector.broadcast %c1_i32_80 : i32 to vector<1x4x1x32xi32>
    %164 = arith.addi %158, %163 : vector<1x4x1x32xi32>
    %c8_i32_81 = arith.constant 8 : i32
    %165 = vector.broadcast %c8_i32_81 : i32 to vector<1x4x1x32xi32>
    %166 = arith.muli %164, %165 : vector<1x4x1x32xi32>
    %167 = arith.cmpi slt, %159, %166 : vector<1x4x1x32xi32>
    %168 = arith.andi %162, %167 : vector<1x4x1x32xi1>
    %169 = arith.extui %168 : vector<1x4x1x32xi1> to vector<1x4x1x32xi32>
    %170 = arith.sitofp %169 : vector<1x4x1x32xi32> to vector<1x4x1x32xf32>
    %171 = vector.shape_cast %152 : vector<16x32xf32> to vector<2x1x8x32xf32>
    %172 = vector.broadcast %171 : vector<2x1x8x32xf32> to vector<2x4x8x32xf32>
    %173 = vector.broadcast %170 : vector<1x4x1x32xf32> to vector<2x4x8x32xf32>
    %174 = arith.mulf %172, %173 : vector<2x4x8x32xf32>
    %175 = vector.shape_cast %174 : vector<2x4x8x32xf32> to vector<2x32x32xf32>
    %176 = vector.shape_cast %157 : vector<16x32xf32> to vector<2x1x8x32xf32>
    %177 = vector.broadcast %176 : vector<2x1x8x32xf32> to vector<2x4x8x32xf32>
    %178 = vector.broadcast %170 : vector<1x4x1x32xf32> to vector<2x4x8x32xf32>
    %179 = arith.mulf %177, %178 : vector<2x4x8x32xf32>
    %180 = vector.shape_cast %179 : vector<2x4x8x32xf32> to vector<2x32x32xf32>
    %181 = vector.shape_cast %147 : vector<16x32xf32> to vector<2x8x32xf32>
    %182 = arith.truncf %181 : vector<2x8x32xf32> to vector<2x8x32xbf16>
    %183 = arith.truncf %175 : vector<2x32x32xf32> to vector<2x32x32xbf16>
    "tpu.trace_start"() <{level = 10 : i32, message = "bqc,bmc->bqm"}> : () -> ()
    %cst_82 = arith.constant dense<0.000000e+00> : vector<2x8x32xf32>
    %184 = tpu.matmul %182, %183, %cst_82 {dimension_numbers = #tpu.dot_dimension_numbers<[2], [2], [1], [1], [0, 0, 0, 1, 1, 1], [0], [0]>} : vector<2x8x32xbf16>, vector<2x32x32xbf16>, vector<2x8x32xf32> -> vector<2x8x32xf32>
    "tpu.trace_stop"() : () -> ()
    %cst_83 = arith.constant dense<0xFF800000> : vector<2x8xf32>
    %185 = vector.multi_reduction <maximumf>, %184, %cst_83 [2] : vector<2x8x32xf32> to vector<2x8xf32>
    %186 = vector.shape_cast %185 : vector<2x8xf32> to vector<2x8x1xf32>
    %187 = vector.broadcast %186 : vector<2x8x1xf32> to vector<2x8x32xf32>
    %188 = arith.subf %184, %187 : vector<2x8x32xf32>
    %189 = math.exp %188 : vector<2x8x32xf32>
    %190 = vector.shape_cast %189 : vector<2x8x32xf32> to vector<16x32xf32>
    %191 = tpu.iota {dimensions = array<i32: 0>} : vector<32x4xi32>
    %192 = tpu.iota {dimensions = array<i32: 1>} : vector<32x4xi32>
    %c8_i32_84 = arith.constant 8 : i32
    %193 = vector.broadcast %c8_i32_84 : i32 to vector<32x4xi32>
    %194 = arith.muli %192, %193 : vector<32x4xi32>
    %195 = arith.cmpi sge, %191, %194 : vector<32x4xi32>
    %c1_i32_85 = arith.constant 1 : i32
    %196 = vector.broadcast %c1_i32_85 : i32 to vector<32x4xi32>
    %197 = arith.addi %192, %196 : vector<32x4xi32>
    %c8_i32_86 = arith.constant 8 : i32
    %198 = vector.broadcast %c8_i32_86 : i32 to vector<32x4xi32>
    %199 = arith.muli %197, %198 : vector<32x4xi32>
    %200 = arith.cmpi slt, %191, %199 : vector<32x4xi32>
    %201 = arith.andi %195, %200 : vector<32x4xi1>
    %202 = arith.extui %201 : vector<32x4xi1> to vector<32x4xi32>
    %203 = arith.sitofp %202 : vector<32x4xi32> to vector<32x4xf32>
    %204 = tpu.iota {dimensions = array<i32: 1>} : vector<4x32xi32>
    %205 = tpu.iota {dimensions = array<i32: 0>} : vector<4x32xi32>
    %c8_i32_87 = arith.constant 8 : i32
    %206 = vector.broadcast %c8_i32_87 : i32 to vector<4x32xi32>
    %207 = arith.muli %205, %206 : vector<4x32xi32>
    %208 = arith.cmpi sge, %204, %207 : vector<4x32xi32>
    %c1_i32_88 = arith.constant 1 : i32
    %209 = vector.broadcast %c1_i32_88 : i32 to vector<4x32xi32>
    %210 = arith.addi %205, %209 : vector<4x32xi32>
    %c8_i32_89 = arith.constant 8 : i32
    %211 = vector.broadcast %c8_i32_89 : i32 to vector<4x32xi32>
    %212 = arith.muli %210, %211 : vector<4x32xi32>
    %213 = arith.cmpi slt, %204, %212 : vector<4x32xi32>
    %214 = arith.andi %208, %213 : vector<4x32xi1>
    %215 = arith.extui %214 : vector<4x32xi1> to vector<4x32xi32>
    %216 = arith.sitofp %215 : vector<4x32xi32> to vector<4x32xf32>
    %cst_90 = arith.constant dense<0.000000e+00> : vector<16x4xf32>
    %217 = tpu.matmul %190, %203, %cst_90 {dimension_numbers = #tpu.dot_dimension_numbers<[1], [0], [0], [1], [0, 0, 1, 1], [], []>} : vector<16x32xf32>, vector<32x4xf32>, vector<16x4xf32> -> vector<16x4xf32>
    %218 = tpu.reciprocal %217 {approx = true} : vector<16x4xf32> -> vector<16x4xf32>
    %cst_91 = arith.constant dense<0.000000e+00> : vector<16x32xf32>
    %219 = tpu.matmul %218, %216, %cst_91 {dimension_numbers = #tpu.dot_dimension_numbers<[1], [0], [0], [1], [0, 0, 1, 1], [], []>} : vector<16x4xf32>, vector<4x32xf32>, vector<16x32xf32> -> vector<16x32xf32>
    %220 = arith.mulf %190, %219 : vector<16x32xf32>
    %221 = vector.shape_cast %220 : vector<16x32xf32> to vector<2x8x32xf32>
    %222 = arith.truncf %221 : vector<2x8x32xf32> to vector<2x8x32xbf16>
    %223 = arith.truncf %180 : vector<2x32x32xf32> to vector<2x32x32xbf16>
    "tpu.trace_start"() <{level = 10 : i32, message = "bqm,bmc->bqc"}> : () -> ()
    %cst_92 = arith.constant dense<0.000000e+00> : vector<2x8x32xf32>
    %224 = tpu.matmul %222, %223, %cst_92 {dimension_numbers = #tpu.dot_dimension_numbers<[2], [1], [1], [2], [0, 0, 0, 1, 1, 2], [0], [0]>} : vector<2x8x32xbf16>, vector<2x32x32xbf16>, vector<2x8x32xf32> -> vector<2x8x32xf32>
    "tpu.trace_stop"() : () -> ()
    %225 = vector.shape_cast %224 : vector<2x8x32xf32> to vector<16x32xf32>
    %226 = arith.truncf %225 : vector<16x32xf32> to vector<16x32xbf16>
    %227 = arith.truncf %16 : vector<32x32xf32> to vector<32x32xbf16>
    %cst_93 = arith.constant dense<0.000000e+00> : vector<16x32xf32>
    %228 = tpu.matmul %226, %227, %cst_93 {dimension_numbers = #tpu.dot_dimension_numbers<[1], [0], [0], [1], [0, 0, 1, 1], [], []>} : vector<16x32xbf16>, vector<32x32xbf16>, vector<16x32xf32> -> vector<16x32xf32>
    %229 = vector.broadcast %17 : vector<1x32xf32> to vector<16x32xf32>
    %230 = arith.addf %228, %229 : vector<16x32xf32>
    %231 = arith.addf %140, %230 : vector<16x32xf32>
    %cst_94 = arith.constant dense<0.000000e+00> : vector<16xf32>
    %232 = vector.multi_reduction <add>, %231, %cst_94 [1] : vector<16x32xf32> to vector<16xf32>
    %233 = vector.shape_cast %232 : vector<16xf32> to vector<16x1xf32>
    %cst_95 = arith.constant 3.200000e+01 : f32
    %234 = vector.broadcast %cst_95 : f32 to vector<16x1xf32>
    %235 = arith.divf %233, %234 : vector<16x1xf32>
    %236 = vector.broadcast %235 : vector<16x1xf32> to vector<16x32xf32>
    %237 = arith.subf %231, %236 : vector<16x32xf32>
    %238 = arith.mulf %237, %237 : vector<16x32xf32>
    %cst_96 = arith.constant dense<0.000000e+00> : vector<16xf32>
    %239 = vector.multi_reduction <add>, %238, %cst_96 [1] : vector<16x32xf32> to vector<16xf32>
    %240 = vector.shape_cast %239 : vector<16xf32> to vector<16x1xf32>
    %cst_97 = arith.constant 3.200000e+01 : f32
    %241 = vector.broadcast %cst_97 : f32 to vector<16x1xf32>
    %242 = arith.divf %240, %241 : vector<16x1xf32>
    %243 = vector.broadcast %235 : vector<16x1xf32> to vector<16x32xf32>
    %244 = arith.subf %231, %243 : vector<16x32xf32>
    %cst_98 = arith.constant 9.99999974E-6 : f32
    %245 = vector.broadcast %cst_98 : f32 to vector<16x1xf32>
    %246 = arith.addf %242, %245 : vector<16x1xf32>
    %247 = math.rsqrt %246 : vector<16x1xf32>
    %248 = vector.broadcast %247 : vector<16x1xf32> to vector<16x32xf32>
    %249 = arith.mulf %244, %248 : vector<16x32xf32>
    %250 = vector.broadcast %24 : vector<1x32xf32> to vector<16x32xf32>
    %251 = arith.mulf %249, %250 : vector<16x32xf32>
    %252 = vector.broadcast %25 : vector<1x32xf32> to vector<16x32xf32>
    %253 = arith.addf %251, %252 : vector<16x32xf32>
    %254 = arith.truncf %253 : vector<16x32xf32> to vector<16x32xbf16>
    %255 = arith.truncf %18 : vector<32x128xf32> to vector<32x128xbf16>
    %cst_99 = arith.constant dense<0.000000e+00> : vector<16x128xf32>
    %256 = tpu.matmul %254, %255, %cst_99 {dimension_numbers = #tpu.dot_dimension_numbers<[1], [0], [0], [1], [0, 0, 1, 1], [], []>} : vector<16x32xbf16>, vector<32x128xbf16>, vector<16x128xf32> -> vector<16x128xf32>
    %257 = vector.broadcast %19 : vector<1x128xf32> to vector<16x128xf32>
    %258 = arith.addf %256, %257 : vector<16x128xf32>
    %cst_100 = arith.constant 5.000000e-01 : f32
    %259 = vector.broadcast %cst_100 : f32 to vector<16x128xf32>
    %260 = arith.mulf %259, %258 : vector<16x128xf32>
    %cst_101 = arith.constant 0.707106769 : f32
    %261 = vector.broadcast %cst_101 : f32 to vector<16x128xf32>
    %262 = arith.mulf %258, %261 : vector<16x128xf32>
    %263 = math.erf %262 : vector<16x128xf32>
    %cst_102 = arith.constant 1.000000e+00 : f32
    %264 = vector.broadcast %cst_102 : f32 to vector<16x128xf32>
    %265 = arith.addf %264, %263 : vector<16x128xf32>
    %266 = arith.mulf %260, %265 : vector<16x128xf32>
    %267 = arith.truncf %266 : vector<16x128xf32> to vector<16x128xbf16>
    %268 = arith.truncf %20 : vector<128x32xf32> to vector<128x32xbf16>
    %cst_103 = arith.constant dense<0.000000e+00> : vector<16x32xf32>
    %269 = tpu.matmul %267, %268, %cst_103 {dimension_numbers = #tpu.dot_dimension_numbers<[1], [0], [0], [1], [0, 0, 1, 1], [], []>} : vector<16x128xbf16>, vector<128x32xbf16>, vector<16x32xf32> -> vector<16x32xf32>
    %270 = vector.broadcast %21 : vector<1x32xf32> to vector<16x32xf32>
    %271 = arith.addf %269, %270 : vector<16x32xf32>
    %272 = arith.addf %253, %271 : vector<16x32xf32>
    %cst_104 = arith.constant dense<0.000000e+00> : vector<16xf32>
    %273 = vector.multi_reduction <add>, %272, %cst_104 [1] : vector<16x32xf32> to vector<16xf32>
    %274 = vector.shape_cast %273 : vector<16xf32> to vector<16x1xf32>
    %cst_105 = arith.constant 3.200000e+01 : f32
    %275 = vector.broadcast %cst_105 : f32 to vector<16x1xf32>
    %276 = arith.divf %274, %275 : vector<16x1xf32>
    %277 = vector.broadcast %276 : vector<16x1xf32> to vector<16x32xf32>
    %278 = arith.subf %272, %277 : vector<16x32xf32>
    %279 = arith.mulf %278, %278 : vector<16x32xf32>
    %cst_106 = arith.constant dense<0.000000e+00> : vector<16xf32>
    %280 = vector.multi_reduction <add>, %279, %cst_106 [1] : vector<16x32xf32> to vector<16xf32>
    %281 = vector.shape_cast %280 : vector<16xf32> to vector<16x1xf32>
    %cst_107 = arith.constant 3.200000e+01 : f32
    %282 = vector.broadcast %cst_107 : f32 to vector<16x1xf32>
    %283 = arith.divf %281, %282 : vector<16x1xf32>
    %284 = vector.broadcast %276 : vector<16x1xf32> to vector<16x32xf32>
    %285 = arith.subf %272, %284 : vector<16x32xf32>
    %cst_108 = arith.constant 9.99999974E-6 : f32
    %286 = vector.broadcast %cst_108 : f32 to vector<16x1xf32>
    %287 = arith.addf %283, %286 : vector<16x1xf32>
    %288 = math.rsqrt %287 : vector<16x1xf32>
    %289 = vector.broadcast %288 : vector<16x1xf32> to vector<16x32xf32>
    %290 = arith.mulf %285, %289 : vector<16x32xf32>
    %291 = vector.broadcast %26 : vector<1x32xf32> to vector<16x32xf32>
    %292 = arith.mulf %290, %291 : vector<16x32xf32>
    %293 = vector.broadcast %27 : vector<1x32xf32> to vector<16x32xf32>
    %294 = arith.addf %292, %293 : vector<16x32xf32>
    %c0_109 = arith.constant 0 : index
    %c0_110 = arith.constant 0 : index
    %295 = vector.load %arg28[%c0_109, %c0_110] : memref<16x32xf32, #tpu.memory_space<vmem>>, vector<16x32xf32>
    tpu.vector_store %arg28[%c0_109, %c0_110], %294 {strides = array<i32>} : memref<16x32xf32, #tpu.memory_space<vmem>>, vector<16x32xf32>,
    return
  }
}

</mosaic_0001>

<llo_original>
// kernel: tpu_custom_call.1
$region0: #{tpu_custom_call.1}
  #allocation0 [shape = 'u32[]', space=smem, size = 0x4, offset = 0x4, fixed_abs, tag = 'smem constant byte address 0x4 - core index']
  #allocation1 [shape = 'u32[144,128]{1,0:T(1,128)}', space=vmem, size = 0x12000, scoped, tag = 'internal scratch']
  %s0 = inlined_call_operand.hbm [shape: f32[16,32], index: 0, kind: input, shape index: {}]
  %s1 = inlined_call_operand.vmem [shape: f32[32,32], index: 1, kind: input, shape index: {}]
  %s2 = inlined_call_operand.vmem [shape: f32[32,32], index: 2, kind: input, shape index: {}]
  %s3 = inlined_call_operand.vmem [shape: f32[1,32], index: 3, kind: input, shape index: {}]
  %s4 = inlined_call_operand.vmem [shape: f32[32,32], index: 4, kind: input, shape index: {}]
  %s5 = inlined_call_operand.vmem [shape: f32[1,32], index: 5, kind: input, shape index: {}]
  %s6 = inlined_call_operand.vmem [shape: f32[32,32], index: 6, kind: input, shape index: {}]
  %s7 = inlined_call_operand.vmem [shape: f32[1,32], index: 7, kind: input, shape index: {}]
  %s8 = inlined_call_operand.vmem [shape: f32[32,32], index: 8, kind: input, shape index: {}]
  %s9 = inlined_call_operand.vmem [shape: f32[1,32], index: 9, kind: input, shape index: {}]
  %s10 = inlined_call_operand.hbm [shape: f32[32,32], index: 10, kind: input, shape index: {}]
  %s11 = inlined_call_operand.hbm [shape: f32[1,32], index: 11, kind: input, shape index: {}]
  %s12 = inlined_call_operand.hbm [shape: f32[32,32], index: 12, kind: input, shape index: {}]
  %s13 = inlined_call_operand.hbm [shape: f32[1,32], index: 13, kind: input, shape index: {}]
  %s14 = inlined_call_operand.hbm [shape: f32[32,32], index: 14, kind: input, shape index: {}]
  %s15 = inlined_call_operand.hbm [shape: f32[1,32], index: 15, kind: input, shape index: {}]
  %s16 = inlined_call_operand.hbm [shape: f32[32,32], index: 16, kind: input, shape index: {}]
  %s17 = inlined_call_operand.hbm [shape: f32[1,32], index: 17, kind: input, shape index: {}]
  %s18 = inlined_call_operand.hbm [shape: f32[32,128], index: 18, kind: input, shape index: {}]
  %s19 = inlined_call_operand.hbm [shape: f32[1,128], index: 19, kind: input, shape index: {}]
  %s20 = inlined_call_operand.vmem [shape: f32[128,32], index: 20, kind: input, shape index: {}]
  %s21 = inlined_call_operand.hbm [shape: f32[1,32], index: 21, kind: input, shape index: {}]
  %s22 = inlined_call_operand.vmem [shape: f32[1,32], index: 22, kind: input, shape index: {}]
  %s23 = inlined_call_operand.vmem [shape: f32[1,32], index: 23, kind: input, shape index: {}]
  %s24 = inlined_call_operand.vmem [shape: f32[1,32], index: 24, kind: input, shape index: {}]
  %s25 = inlined_call_operand.vmem [shape: f32[1,32], index: 25, kind: input, shape index: {}]
  %s26 = inlined_call_operand.vmem [shape: f32[1,32], index: 26, kind: input, shape index: {}]
  %s27 = inlined_call_operand.vmem [shape: f32[1,32], index: 27, kind: input, shape index: {}]
  %s28 = inlined_call_operand.hbm [shape: f32[16,32], index: 28, kind: output, shape index: {}]
  %s29 = sld [smem:[#allocation0]]
  $region170: #{tpu_custom_call.1} parent=0
    _
  %s31 = ssub.s32 1, %s29
  %s32 = scalar_select 0, %s31, %s29
  $region1: #{tpu_custom_call.1} parent=0
    #allocation2 [shape = 'u8[8192]{0}', space=vmem, size = 0x2000, scoped, tag = 'input window, operand 0, single buffered']
    #allocation3 [shape = 's32[1]{0}', space=sflag, size = 0x4, scoped, tag = 'scoped memory for tpu_custom_call.1']
    #allocation4 [shape = 's32[1]{0}', space=sflag, size = 0x4, scoped, tag = 'scoped memory for tpu_custom_call.1']
    #allocation5 [shape = 'u8[16384]{0}', space=vmem, size = 0x4000, scoped, tag = 'input window, operand 10, single buffered']
    #allocation6 [shape = 's32[1]{0}', space=sflag, size = 0x4, scoped, tag = 'scoped memory for tpu_custom_call.1']
    #allocation7 [shape = 'u8[512]{0}', space=vmem, size = 0x400, scoped, tag = 'input window, operand 11, single buffered']
    #allocation8 [shape = 'u8[16384]{0}', space=vmem, size = 0x4000, scoped, tag = 'input window, operand 12, single buffered']
    #allocation9 [shape = 's32[1]{0}', space=sflag, size = 0x4, scoped, tag = 'scoped memory for tpu_custom_call.1']
    #allocation10 [shape = 'u8[512]{0}', space=vmem, size = 0x400, scoped, tag = 'input window, operand 13, single buffered']
    #allocation11 [shape = 'u8[16384]{0}', space=vmem, size = 0x4000, scoped, tag = 'input window, operand 14, single buffered']
    #allocation12 [shape = 's32[1]{0}', space=sflag, size = 0x4, scoped, tag = 'scoped memory for tpu_custom_call.1']
    #allocation13 [shape = 'u8[512]{0}', space=vmem, size = 0x400, scoped, tag = 'input window, operand 15, single buffered']
    #allocation14 [shape = 'u8[16384]{0}', space=vmem, size = 0x4000, scoped, tag = 'input window, operand 16, single buffered']
    #allocation15 [shape = 's32[1]{0}', space=sflag, size = 0x4, scoped, tag = 'scoped memory for tpu_custom_call.1']
    #allocation16 [shape = 'u8[512]{0}', space=vmem, size = 0x400, scoped, tag = 'input window, operand 17, single buffered']
    #allocation17 [shape = 'u8[16384]{0}', space=vmem, size = 0x4000, scoped, tag = 'input window, operand 18, single buffered']
    #allocation18 [shape = 's32[1]{0}', space=sflag, size = 0x4, scoped, tag = 'scoped memory for tpu_custom_call.1']
    #allocation19 [shape = 'u8[512]{0}', space=vmem, size = 0x400, scoped, tag = 'input window, operand 19, single buffered']
    #allocation20 [shape = 'u8[512]{0}', space=vmem, size = 0x400, scoped, tag = 'input window, operand 21, single buffered']
    #allocation21 [shape = 's32[1]{0}', space=sflag, size = 0x4, scoped, tag = 'scoped memory for tpu_custom_call.1']
    #allocation22 [shape = 'u8[8192]{0}', space=vmem, size = 0x2000, scoped, tag = 'output window, operand 0, single buffered']
    %33 = vsyncpa [#allocation3], 0
    %34 = vsyncpa [#allocation6], 0
    %35 = vsyncpa [#allocation9], 0
    %36 = vsyncpa [#allocation12], 0
    %37 = vsyncpa [#allocation15], 0
    %38 = vsyncpa [#allocation18], 0
    %39 = vsyncpa [#allocation21], 0
    %40 = vsyncpa [#allocation4], 0
    // Predicated region
    $region2: #{tpu_custom_call.1} parent=1 // pred_check
      _
    $region3: #{tpu_custom_call.1} parent=1 // pred_check_branch
      %42 = sbr.rel (0) target = $region5
    $region4: #{tpu_custom_call.1} parent=1 // pred_region
      %s44 = ssub.s32 256, 256
      %45 = vsyncadd [#allocation3], %s44
      %s46 = sshll.u32 [#allocation2], 4
      %s47 = int_to_ptr.vmem [resolvable:$true] %s46
      %52 = dma.hbm_to_vmem [thread:$0]  %s0, 256, %s47, [#allocation3], 128, 128, 8
    $region5: #{tpu_custom_call.1} parent=1 // pred_fallthru
      _
    // Predicated region
    $region6: #{tpu_custom_call.1} parent=1 // pred_check
      _
    $region7: #{tpu_custom_call.1} parent=1 // pred_check_branch
      %54 = sbr.rel (0) target = $region9
    $region8: #{tpu_custom_call.1} parent=1 // pred_region
      _
    $region9: #{tpu_custom_call.1} parent=1 // pred_fallthru
      _
    // Predicated region
    $region10: #{tpu_custom_call.1} parent=1 // pred_check
      _
    $region11: #{tpu_custom_call.1} parent=1 // pred_check_branch
      %56 = sbr.rel (0) target = $region13
    $region12: #{tpu_custom_call.1} parent=1 // pred_region
      _
    $region13: #{tpu_custom_call.1} parent=1 // pred_fallthru
      _
    // Predicated region
    $region14: #{tpu_custom_call.1} parent=1 // pred_check
      _
    $region15: #{tpu_custom_call.1} parent=1 // pred_check_branch
      %58 = sbr.rel (0) target = $region17
    $region16: #{tpu_custom_call.1} parent=1 // pred_region
      _
    $region17: #{tpu_custom_call.1} parent=1 // pred_fallthru
      _
    // Predicated region
    $region18: #{tpu_custom_call.1} parent=1 // pred_check
      _
    $region19: #{tpu_custom_call.1} parent=1 // pred_check_branch
      %60 = sbr.rel (0) target = $region21
    $region20: #{tpu_custom_call.1} parent=1 // pred_region
      _
    $region21: #{tpu_custom_call.1} parent=1 // pred_fallthru
      _
    // Predicated region
    $region22: #{tpu_custom_call.1} parent=1 // pred_check
      _
    $region23: #{tpu_custom_call.1} parent=1 // pred_check_branch
      %62 = sbr.rel (0) target = $region25
    $region24: #{tpu_custom_call.1} parent=1 // pred_region
      _
    $region25: #{tpu_custom_call.1} parent=1 // pred_fallthru
      _
    // Predicated region
    $region26: #{tpu_custom_call.1} parent=1 // pred_check
      _
    $region27: #{tpu_custom_call.1} parent=1 // pred_check_branch
      %64 = sbr.rel (0) target = $region29
    $region28: #{tpu_custom_call.1} parent=1 // pred_region
      _
    $region29: #{tpu_custom_call.1} parent=1 // pred_fallthru
      _
    // Predicated region
    $region30: #{tpu_custom_call.1} parent=1 // pred_check
      _
    $region31: #{tpu_custom_call.1} parent=1 // pred_check_branch
      %66 = sbr.rel (0) target = $region33
    $region32: #{tpu_custom_call.1} parent=1 // pred_region
      _
    $region33: #{tpu_custom_call.1} parent=1 // pred_fallthru
      _
    // Predicated region
    $region34: #{tpu_custom_call.1} parent=1 // pred_check
      _
    $region35: #{tpu_custom_call.1} parent=1 // pred_check_branch
      %68 = sbr.rel (0) target = $region37
    $region36: #{tpu_custom_call.1} parent=1 // pred_region
      _
    $region37: #{tpu_custom_call.1} parent=1 // pred_fallthru
      _
    // Predicated region
    $region38: #{tpu_custom_call.1} parent=1 // pred_check
      _
    $region39: #{tpu_custom_call.1} parent=1 // pred_check_branch
      %70 = sbr.rel (0) target = $region41
    $region40: #{tpu_custom_call.1} parent=1 // pred_region
      _
    $region41: #{tpu_custom_call.1} parent=1 // pred_fallthru
      _
    // Predicated region
    $region42: #{tpu_custom_call.1} parent=1 // pred_check
      _
    $region43: #{tpu_custom_call.1} parent=1 // pred_check_branch
      %72 = sbr.rel (0) target = $region45
    $region44: #{tpu_custom_call.1} parent=1 // pred_region
      %s74 = ssub.s32 512, 512
      %75 = vsyncadd [#allocation6], %s74
      %s76 = sshll.u32 [#allocation5], 4
      %s77 = int_to_ptr.vmem [resolvable:$true] %s76
      %82 = dma.hbm_to_vmem [thread:$0]  %s10, 512, %s77, [#allocation6], 128, 128, 8
    $region45: #{tpu_custom_call.1} parent=1 // pred_fallthru
      _
    // Predicated region
    $region46: #{tpu_custom_call.1} parent=1 // pred_check
      _
    $region47: #{tpu_custom_call.1} parent=1 // pred_check_branch
      %84 = sbr.rel (0) target = $region49
    $region48: #{tpu_custom_call.1} parent=1 // pred_region
      %s86 = ssub.s32 16, 16
      %87 = vsyncadd [#allocation6], %s86
      %s89 = sshll.u32 [#allocation7], 4
      %s90 = int_to_ptr.vmem [resolvable:$true] %s89
      %92 = dma.hbm_to_vmem [thread:$0]  %s11, 16, %s90, [#allocation6]
    $region49: #{tpu_custom_call.1} parent=1 // pred_fallthru
      _
    // Predicated region
    $region50: #{tpu_custom_call.1} parent=1 // pred_check
      _
    $region51: #{tpu_custom_call.1} parent=1 // pred_check_branch
      %94 = sbr.rel (0) target = $region53
    $region52: #{tpu_custom_call.1} parent=1 // pred_region
      %s96 = ssub.s32 512, 512
      %97 = vsyncadd [#allocation9], %s96
      %s98 = sshll.u32 [#allocation8], 4
      %s99 = int_to_ptr.vmem [resolvable:$true] %s98
      %104 = dma.hbm_to_vmem [thread:$0]  %s12, 512, %s99, [#allocation9], 128, 128, 8
    $region53: #{tpu_custom_call.1} parent=1 // pred_fallthru
      _
    // Predicated region
    $region54: #{tpu_custom_call.1} parent=1 // pred_check
      _
    $region55: #{tpu_custom_call.1} parent=1 // pred_check_branch
      %106 = sbr.rel (0) target = $region57
    $region56: #{tpu_custom_call.1} parent=1 // pred_region
      %s108 = ssub.s32 16, 16
      %109 = vsyncadd [#allocation9], %s108
      %s111 = sshll.u32 [#allocation10], 4
      %s112 = int_to_ptr.vmem [resolvable:$true] %s111
      %114 = dma.hbm_to_vmem [thread:$0]  %s13, 16, %s112, [#allocation9]
    $region57: #{tpu_custom_call.1} parent=1 // pred_fallthru
      _
    // Predicated region
    $region58: #{tpu_custom_call.1} parent=1 // pred_check
      _
    $region59: #{tpu_custom_call.1} parent=1 // pred_check_branch
      %116 = sbr.rel (0) target = $region61
    $region60: #{tpu_custom_call.1} parent=1 // pred_region
      %s118 = ssub.s32 512, 512
      %119 = vsyncadd [#allocation12], %s118
      %s120 = sshll.u32 [#allocation11], 4
      %s121 = int_to_ptr.vmem [resolvable:$true] %s120
      %126 = dma.hbm_to_vmem [thread:$0]  %s14, 512, %s121, [#allocation12], 128, 128, 8
    $region61: #{tpu_custom_call.1} parent=1 // pred_fallthru
      _
    // Predicated region
    $region62: #{tpu_custom_call.1} parent=1 // pred_check
      _
    $region63: #{tpu_custom_call.1} parent=1 // pred_check_branch
      %128 = sbr.rel (0) target = $region65
    $region64: #{tpu_custom_call.1} parent=1 // pred_region
      %s130 = ssub.s32 16, 16
      %131 = vsyncadd [#allocation12], %s130
      %s133 = sshll.u32 [#allocation13], 4
      %s134 = int_to_ptr.vmem [resolvable:$true] %s133
      %136 = dma.hbm_to_vmem [thread:$0]  %s15, 16, %s134, [#allocation12]
    $region65: #{tpu_custom_call.1} parent=1 // pred_fallthru
      _
    // Predicated region
    $region66: #{tpu_custom_call.1} parent=1 // pred_check
      _
    $region67: #{tpu_custom_call.1} parent=1 // pred_check_branch
      %138 = sbr.rel (0) target = $region69
    $region68: #{tpu_custom_call.1} parent=1 // pred_region
      %s140 = ssub.s32 512, 512
      %141 = vsyncadd [#allocation15], %s140
      %s142 = sshll.u32 [#allocation14], 4
      %s143 = int_to_ptr.vmem [resolvable:$true] %s142
      %148 = dma.hbm_to_vmem [thread:$0]  %s16, 512, %s143, [#allocation15], 128, 128, 8
    $region69: #{tpu_custom_call.1} parent=1 // pred_fallthru
      _
    // Predicated region
    $region70: #{tpu_custom_call.1} parent=1 // pred_check
      _
    $region71: #{tpu_custom_call.1} parent=1 // pred_check_branch
      %150 = sbr.rel (0) target = $region73
    $region72: #{tpu_custom_call.1} parent=1 // pred_region
      %s152 = ssub.s32 16, 16
      %153 = vsyncadd [#allocation15], %s152
      %s155 = sshll.u32 [#allocation16], 4
      %s156 = int_to_ptr.vmem [resolvable:$true] %s155
      %158 = dma.hbm_to_vmem [thread:$0]  %s17, 16, %s156, [#allocation15]
    $region73: #{tpu_custom_call.1} parent=1 // pred_fallthru
      _
    // Predicated region
    $region74: #{tpu_custom_call.1} parent=1 // pred_check
      _
    $region75: #{tpu_custom_call.1} parent=1 // pred_check_branch
      %160 = sbr.rel (0) target = $region77
    $region76: #{tpu_custom_call.1} parent=1 // pred_region
      %s162 = ssub.s32 512, 512
      %163 = vsyncadd [#allocation18], %s162
      %s164 = sshll.u32 [#allocation17], 4
      %s165 = int_to_ptr.vmem [resolvable:$true] %s164
      %170 = dma.hbm_to_vmem [thread:$0]  %s18, 512, %s165, [#allocation18], 128, 128, 8
    $region77: #{tpu_custom_call.1} parent=1 // pred_fallthru
      _
    // Predicated region
    $region78: #{tpu_custom_call.1} parent=1 // pred_check
      _
    $region79: #{tpu_custom_call.1} parent=1 // pred_check_branch
      %172 = sbr.rel (0) target = $region81
    $region80: #{tpu_custom_call.1} parent=1 // pred_region
      %s174 = ssub.s32 16, 16
      %175 = vsyncadd [#allocation18], %s174
      %s177 = sshll.u32 [#allocation19], 4
      %s178 = int_to_ptr.vmem [resolvable:$true] %s177
      %180 = dma.hbm_to_vmem [thread:$0]  %s19, 16, %s178, [#allocation18]
    $region81: #{tpu_custom_call.1} parent=1 // pred_fallthru
      _
    // Predicated region
    $region82: #{tpu_custom_call.1} parent=1 // pred_check
      _
    $region83: #{tpu_custom_call.1} parent=1 // pred_check_branch
      %182 = sbr.rel (0) target = $region85
    $region84: #{tpu_custom_call.1} parent=1 // pred_region
      _
    $region85: #{tpu_custom_call.1} parent=1 // pred_fallthru
      _
    // Predicated region
    $region86: #{tpu_custom_call.1} parent=1 // pred_check
      _
    $region87: #{tpu_custom_call.1} parent=1 // pred_check_branch
      %184 = sbr.rel (0) target = $region89
    $region88: #{tpu_custom_call.1} parent=1 // pred_region
      %s186 = ssub.s32 16, 16
      %187 = vsyncadd [#allocation21], %s186
      %s189 = sshll.u32 [#allocation20], 4
      %s190 = int_to_ptr.vmem [resolvable:$true] %s189
      %192 = dma.hbm_to_vmem [thread:$0]  %s21, 16, %s190, [#allocation21]
    $region89: #{tpu_custom_call.1} parent=1 // pred_fallthru
      _
    // Predicated region
    $region90: #{tpu_custom_call.1} parent=1 // pred_check
      _
    $region91: #{tpu_custom_call.1} parent=1 // pred_check_branch
      %194 = sbr.rel (0) target = $region93
    $region92: #{tpu_custom_call.1} parent=1 // pred_region
      _
    $region93: #{tpu_custom_call.1} parent=1 // pred_fallthru
      _
    // Predicated region
    $region94: #{tpu_custom_call.1} parent=1 // pred_check
      _
    $region95: #{tpu_custom_call.1} parent=1 // pred_check_branch
      %196 = sbr.rel (0) target = $region97
    $region96: #{tpu_custom_call.1} parent=1 // pred_region
      _
    $region97: #{tpu_custom_call.1} parent=1 // pred_fallthru
      _
    // Predicated region
    $region98: #{tpu_custom_call.1} parent=1 // pred_check
      _
    $region99: #{tpu_custom_call.1} parent=1 // pred_check_branch
      %198 = sbr.rel (0) target = $region101
    $region100: #{tpu_custom_call.1} parent=1 // pred_region
      _
    $region101: #{tpu_custom_call.1} parent=1 // pred_fallthru
      _
    // Predicated region
    $region102: #{tpu_custom_call.1} parent=1 // pred_check
      _
    $region103: #{tpu_custom_call.1} parent=1 // pred_check_branch
      %200 = sbr.rel (0) target = $region105
    $region104: #{tpu_custom_call.1} parent=1 // pred_region
      _
    $region105: #{tpu_custom_call.1} parent=1 // pred_fallthru
      _
    // Predicated region
    $region106: #{tpu_custom_call.1} parent=1 // pred_check
      _
    $region107: #{tpu_custom_call.1} parent=1 // pred_check_branch
      %202 = sbr.rel (0) target = $region109
    $region108: #{tpu_custom_call.1} parent=1 // pred_region
      _
    $region109: #{tpu_custom_call.1} parent=1 // pred_fallthru
      _
    // Predicated region
    $region110: #{tpu_custom_call.1} parent=1 // pred_check
      _
    $region111: #{tpu_custom_call.1} parent=1 // pred_check_branch
      %204 = sbr.rel (0) target = $region113
    $region112: #{tpu_custom_call.1} parent=1 // pred_region
      _
    $region113: #{tpu_custom_call.1} parent=1 // pred_fallthru
      _
    // Predicated region
    $region114: #{tpu_custom_call.1} parent=1 // pred_check
      _
    $region115: #{tpu_custom_call.1} parent=1 // pred_check_branch
      %206 = sbr.rel (0) target = $region117
    $region116: #{tpu_custom_call.1} parent=1 // pred_region
      %207 = dma.done [#allocation3], 256
    $region117: #{tpu_custom_call.1} parent=1 // pred_fallthru
      _
    // Predicated region
    $region118: #{tpu_custom_call.1} parent=1 // pred_check
      _
    $region119: #{tpu_custom_call.1} parent=1 // pred_check_branch
      %209 = sbr.rel (0) target = $region121
    $region120: #{tpu_custom_call.1} parent=1 // pred_region
      %210 = dma.done [#allocation6], 512
    $region121: #{tpu_custom_call.1} parent=1 // pred_fallthru
      _
    // Predicated region
    $region122: #{tpu_custom_call.1} parent=1 // pred_check
      _
    $region123: #{tpu_custom_call.1} parent=1 // pred_check_branch
      %212 = sbr.rel (0) target = $region125
    $region124: #{tpu_custom_call.1} parent=1 // pred_region
      %213 = dma.done [#allocation6], 16
    $region125: #{tpu_custom_call.1} parent=1 // pred_fallthru
      _
    // Predicated region
    $region126: #{tpu_custom_call.1} parent=1 // pred_check
      _
    $region127: #{tpu_custom_call.1} parent=1 // pred_check_branch
      %215 = sbr.rel (0) target = $region129
    $region128: #{tpu_custom_call.1} parent=1 // pred_region
      %216 = dma.done [#allocation9], 512
    $region129: #{tpu_custom_call.1} parent=1 // pred_fallthru
      _
    // Predicated region
    $region130: #{tpu_custom_call.1} parent=1 // pred_check
      _
    $region131: #{tpu_custom_call.1} parent=1 // pred_check_branch
      %218 = sbr.rel (0) target = $region133
    $region132: #{tpu_custom_call.1} parent=1 // pred_region
      %219 = dma.done [#allocation9], 16
    $region133: #{tpu_custom_call.1} parent=1 // pred_fallthru
      _
    // Predicated region
    $region134: #{tpu_custom_call.1} parent=1 // pred_check
      _
    $region135: #{tpu_custom_call.1} parent=1 // pred_check_branch
      %221 = sbr.rel (0) target = $region137
    $region136: #{tpu_custom_call.1} parent=1 // pred_region
      %222 = dma.done [#allocation12], 512
    $region137: #{tpu_custom_call.1} parent=1 // pred_fallthru
      _
    // Predicated region
    $region138: #{tpu_custom_call.1} parent=1 // pred_check
      _
    $region139: #{tpu_custom_call.1} parent=1 // pred_check_branch
      %224 = sbr.rel (0) target = $region141
    $region140: #{tpu_custom_call.1} parent=1 // pred_region
      %225 = dma.done [#allocation12], 16
    $region141: #{tpu_custom_call.1} parent=1 // pred_fallthru
      _
    // Predicated region
    $region142: #{tpu_custom_call.1} parent=1 // pred_check
      _
    $region143: #{tpu_custom_call.1} parent=1 // pred_check_branch
      %227 = sbr.rel (0) target = $region145
    $region144: #{tpu_custom_call.1} parent=1 // pred_region
      %228 = dma.done [#allocation15], 512
    $region145: #{tpu_custom_call.1} parent=1 // pred_fallthru
      _
    // Predicated region
    $region146: #{tpu_custom_call.1} parent=1 // pred_check
      _
    $region147: #{tpu_custom_call.1} parent=1 // pred_check_branch
      %230 = sbr.rel (0) target = $region149
    $region148: #{tpu_custom_call.1} parent=1 // pred_region
      %231 = dma.done [#allocation15], 16
    $region149: #{tpu_custom_call.1} parent=1 // pred_fallthru
      _
    // Predicated region
    $region150: #{tpu_custom_call.1} parent=1 // pred_check
      _
    $region151: #{tpu_custom_call.1} parent=1 // pred_check_branch
      %233 = sbr.rel (0) target = $region153
    $region152: #{tpu_custom_call.1} parent=1 // pred_region
      %234 = dma.done [#allocation18], 512
    $region153: #{tpu_custom_call.1} parent=1 // pred_fallthru
      _
    // Predicated region
    $region154: #{tpu_custom_call.1} parent=1 // pred_check
      _
    $region155: #{tpu_custom_call.1} parent=1 // pred_check_branch
      %236 = sbr.rel (0) target = $region157
    $region156: #{tpu_custom_call.1} parent=1 // pred_region
      %237 = dma.done [#allocation18], 16
    $region157: #{tpu_custom_call.1} parent=1 // pred_fallthru
      _
    // Predicated region
    $region158: #{tpu_custom_call.1} parent=1 // pred_check
      _
    $region159: #{tpu_custom_call.1} parent=1 // pred_check_branch
      %239 = sbr.rel (0) target = $region161
    $region160: #{tpu_custom_call.1} parent=1 // pred_region
      %240 = dma.done [#allocation21], 16
    $region161: #{tpu_custom_call.1} parent=1 // pred_fallthru
      _
    %v242 = vld [vmem:[#allocation2] sm:$0xff]
    %v243 = vld [vmem:[#allocation2 + $0x8] sm:$0xff]
    %v244 = vld [vmem:[%s1] sm:$0xff]
    %v245 = vld [vmem:[%s1 + $0x8] sm:$0xff]
    %v246 = vld [vmem:[%s1 + $0x10] sm:$0xff]
    %v247 = vld [vmem:[%s1 + $0x18] sm:$0xff]
    %v248 = vld [vmem:[%s2] sm:$0xff]
    %v249 = vld [vmem:[%s2 + $0x8] sm:$0xff]
    %v250 = vld [vmem:[%s2 + $0x10] sm:$0xff]
    %v251 = vld [vmem:[%s2 + $0x18] sm:$0xff]
    %v252 = vld [vmem:[%s3] sm:$0x1]
    %v253 = vld [vmem:[%s4] sm:$0xff]
    %v254 = vld [vmem:[%s4 + $0x8] sm:$0xff]
    %v255 = vld [vmem:[%s4 + $0x10] sm:$0xff]
    %v256 = vld [vmem:[%s4 + $0x18] sm:$0xff]
    %v257 = vld [vmem:[%s5] sm:$0x1]
    %v258 = vld [vmem:[%s6] sm:$0xff]
    %v259 = vld [vmem:[%s6 + $0x8] sm:$0xff]
    %v260 = vld [vmem:[%s6 + $0x10] sm:$0xff]
    %v261 = vld [vmem:[%s6 + $0x18] sm:$0xff]
    %v262 = vld [vmem:[%s7] sm:$0x1]
    %v263 = vld [vmem:[%s8] sm:$0xff]
    %v264 = vld [vmem:[%s8 + $0x8] sm:$0xff]
    %v265 = vld [vmem:[%s8 + $0x10] sm:$0xff]
    %v266 = vld [vmem:[%s8 + $0x18] sm:$0xff]
    %v267 = vld [vmem:[%s9] sm:$0x1]
    %v268 = vld [vmem:[#allocation5] sm:$0xff]
    %v269 = vld [vmem:[#allocation5 + $0x8] sm:$0xff]
    %v270 = vld [vmem:[#allocation5 + $0x10] sm:$0xff]
    %v271 = vld [vmem:[#allocation5 + $0x18] sm:$0xff]
    %v272 = vld [vmem:[#allocation7] sm:$0x1]
    %v273 = vld [vmem:[#allocation8] sm:$0xff]
    %v274 = vld [vmem:[#allocation8 + $0x8] sm:$0xff]
    %v275 = vld [vmem:[#allocation8 + $0x10] sm:$0xff]
    %v276 = vld [vmem:[#allocation8 + $0x18] sm:$0xff]
    %v277 = vld [vmem:[#allocation10] sm:$0x1]
    %v278 = vld [vmem:[#allocation11] sm:$0xff]
    %v279 = vld [vmem:[#allocation11 + $0x8] sm:$0xff]
    %v280 = vld [vmem:[#allocation11 + $0x10] sm:$0xff]
    %v281 = vld [vmem:[#allocation11 + $0x18] sm:$0xff]
    %v282 = vld [vmem:[#allocation13] sm:$0x1]
    %v283 = vld [vmem:[#allocation14] sm:$0xff]
    %v284 = vld [vmem:[#allocation14 + $0x8] sm:$0xff]
    %v285 = vld [vmem:[#allocation14 + $0x10] sm:$0xff]
    %v286 = vld [vmem:[#allocation14 + $0x18] sm:$0xff]
    %v287 = vld [vmem:[#allocation16] sm:$0x1]
    %v288 = vld [vmem:[#allocation17] sm:$0xff]
    %v289 = vld [vmem:[#allocation17 + $0x8] sm:$0xff]
    %v290 = vld [vmem:[#allocation17 + $0x10] sm:$0xff]
    %v291 = vld [vmem:[#allocation17 + $0x18] sm:$0xff]
    %v292 = vld [vmem:[#allocation19] sm:$0x1]
    %v293 = vld [vmem:[%s20] sm:$0xff]
    %v294 = vld [vmem:[%s20 + $0x8] sm:$0xff]
    %v295 = vld [vmem:[%s20 + $0x10] sm:$0xff]
    %v296 = vld [vmem:[%s20 + $0x18] sm:$0xff]
    %v297 = vld [vmem:[%s20 + $0x20] sm:$0xff]
    %v298 = vld [vmem:[%s20 + $0x28] sm:$0xff]
    %v299 = vld [vmem:[%s20 + $0x30] sm:$0xff]
    %v300 = vld [vmem:[%s20 + $0x38] sm:$0xff]
    %v301 = vld [vmem:[%s20 + $0x40] sm:$0xff]
    %v302 = vld [vmem:[%s20 + $0x48] sm:$0xff]
    %v303 = vld [vmem:[%s20 + $0x50] sm:$0xff]
    %v304 = vld [vmem:[%s20 + $0x58] sm:$0xff]
    %v305 = vld [vmem:[%s20 + $0x60] sm:$0xff]
    %v306 = vld [vmem:[%s20 + $0x68] sm:$0xff]
    %v307 = vld [vmem:[%s20 + $0x70] sm:$0xff]
    %v308 = vld [vmem:[%s20 + $0x78] sm:$0xff]
    %v309 = vld [vmem:[#allocation20] sm:$0x1]
    %v310 = vld [vmem:[%s22] sm:$0x1]
    %v311 = vld [vmem:[%s23] sm:$0x1]
    %v312 = vld [vmem:[%s24] sm:$0x1]
    %v313 = vld [vmem:[%s25] sm:$0x1]
    %v314 = vld [vmem:[%s26] sm:$0x1]
    %v315 = vld [vmem:[%s27] sm:$0x1]
    %v316 = vpack.c.bf16 %v243, %v242
    %v317 = vpack.c.bf16 %v249, %v248
    %v318 = vpack.c.bf16 %v251, %v250
    %v320 = vlaneseq
    %v321 = vshrl.u32 %v320, 7
    %v322 = vsub.s32 0, %v321
    %v323 = vrot.slane %v252, %v322
    %vm325 = vcmask 261120
    %v327 = vsel %vm325, %v316, 0
    %329 = vmatprep.subr.bf16.mxu0 0
    %330 = vmatpush1.bf16.msra.mxu0 0
    %331 = vmatprep.subr.bf16.mxu0 0
    %332 = vmatpush1.bf16.msra.mxu0 0
    %333 = vmatprep.subr.bf16.mxu0 0
    %334 = vmatpush1.bf16.msra.mxu0 0
    %335 = vmatprep.subr.bf16.mxu0 0
    %336 = vmatpush1.bf16.msra.mxu0 0
    %337 = vmatprep.subr.bf16.mxu0 0
    %338 = vmatpush1.bf16.msra.mxu0 0
    %339 = vmatprep.subr.bf16.mxu0 0
    %340 = vmatpush1.bf16.msra.mxu0 0
    %341 = vmatprep.subr.bf16.mxu0 0
    %342 = vmatpush1.bf16.msra.mxu0 %v318
    %343 = vmatprep.subr.bf16.mxu0 0
    %344 = vmatpush1.bf16.msra.mxu0 %v317
    %345 = vmatprep.subr.bf16.mxu0 0
    %346 = vmatpush2.bf16.msra.mxu0 0
    %347 = vmatprep.subr.bf16.mxu0 0
    %348 = vmatpush2.bf16.msra.mxu0 0
    %349 = vmatprep.subr.bf16.mxu0 0
    %350 = vmatpush2.bf16.msra.mxu0 0
    %351 = vmatprep.subr.bf16.mxu0 0
    %352 = vmatpush2.bf16.msra.mxu0 0
    %353 = vmatprep.subr.bf16.mxu0 0
    %354 = vmatpush2.bf16.msra.mxu0 0
    %355 = vmatprep.subr.bf16.mxu0 0
    %356 = vmatpush2.bf16.msra.mxu0 0
    %357 = vmatprep.subr.bf16.mxu0 0
    %358 = vmatpush2.bf16.msra.mxu0 0
    %359 = vmatprep.subr.bf16.mxu0 0
    %360 = vmatpush2.bf16.msra.mxu0 0
    %361 = vmatprep.mubr.bf16.mxu0 0
    %362 = vmatmul.mubr.bf16.gmra.mxu0 %v327
    %v363 = vpop.f32.mrf.mxu0
    %v364 = vadd.f32 %v323, %v363
    %v365 = vpop.f32.mrf.mxu0
    %v366 = vpop.f32.mrf.mxu0
    %v367 = vadd.f32 %v323, %v366
    %v368 = vpop.f32.mrf.mxu0
    %369 = vdwg.mxu0
    %v370 = vmul.f32 %v364, 0.35355338
    %v371 = vmul.f32 %v367, 0.35355338
    %v372 = vpack.c.bf16 %v245, %v244
    %v373 = vpack.c.bf16 %v247, %v246
    %v374 = vpack.c.bf16 %v254, %v253
    %v375 = vpack.c.bf16 %v256, %v255
    %v377 = vlaneseq
    %v378 = vshrl.u32 %v377, 7
    %v379 = vsub.s32 0, %v378
    %v380 = vrot.slane %v257, %v379
    %v383 = vsel %vm325, %v372, 0
    %v386 = vsel %vm325, %v373, 0
    %388 = vmatprep.subr.bf16.mxu0 0
    %389 = vmatpush1.bf16.msra.mxu0 0
    %390 = vmatprep.subr.bf16.mxu0 0
    %391 = vmatpush1.bf16.msra.mxu0 0
    %392 = vmatprep.subr.bf16.mxu0 0
    %393 = vmatpush1.bf16.msra.mxu0 0
    %394 = vmatprep.subr.bf16.mxu0 0
    %395 = vmatpush1.bf16.msra.mxu0 0
    %396 = vmatprep.subr.bf16.mxu0 0
    %397 = vmatpush1.bf16.msra.mxu0 0
    %398 = vmatprep.subr.bf16.mxu0 0
    %399 = vmatpush1.bf16.msra.mxu0 0
    %400 = vmatprep.subr.bf16.mxu0 0
    %401 = vmatpush1.bf16.msra.mxu0 %v375
    %402 = vmatprep.subr.bf16.mxu0 0
    %403 = vmatpush1.bf16.msra.mxu0 %v374
    %404 = vmatprep.subr.bf16.mxu0 0
    %405 = vmatpush2.bf16.msra.mxu0 0
    %406 = vmatprep.subr.bf16.mxu0 0
    %407 = vmatpush2.bf16.msra.mxu0 0
    %408 = vmatprep.subr.bf16.mxu0 0
    %409 = vmatpush2.bf16.msra.mxu0 0
    %410 = vmatprep.subr.bf16.mxu0 0
    %411 = vmatpush2.bf16.msra.mxu0 0
    %412 = vmatprep.subr.bf16.mxu0 0
    %413 = vmatpush2.bf16.msra.mxu0 0
    %414 = vmatprep.subr.bf16.mxu0 0
    %415 = vmatpush2.bf16.msra.mxu0 0
    %416 = vmatprep.subr.bf16.mxu0 0
    %417 = vmatpush2.bf16.msra.mxu0 0
    %418 = vmatprep.subr.bf16.mxu0 0
    %419 = vmatpush2.bf16.msra.mxu0 0
    %420 = vmatprep.mubr.bf16.mxu0 0
    %421 = vmatmul.mubr.bf16.gmra.mxu0 %v383
    %v422 = vpop.f32.mrf.mxu0
    %v423 = vadd.f32 %v380, %v422
    %v424 = vpop.f32.mrf.mxu0
    %v425 = vpop.f32.mrf.mxu0
    %v426 = vadd.f32 %v380, %v425
    %v427 = vpop.f32.mrf.mxu0
    %428 = vmatprep.mubr.bf16.mxu0 0
    %429 = vmatmul.mubr.bf16.gmra.mxu0 %v386
    %v430 = vpop.f32.mrf.mxu0
    %v431 = vadd.f32 %v380, %v430
    %v432 = vpop.f32.mrf.mxu0
    %v433 = vpop.f32.mrf.mxu0
    %v434 = vadd.f32 %v380, %v433
    %v435 = vpop.f32.mrf.mxu0
    %436 = vdwg.mxu0
    %v437 = vpack.c.bf16 %v259, %v258
    %v438 = vpack.c.bf16 %v261, %v260
    %v440 = vlaneseq
    %v441 = vshrl.u32 %v440, 7
    %v442 = vsub.s32 0, %v441
    %v443 = vrot.slane %v262, %v442
    %445 = vmatprep.subr.bf16.mxu0 0
    %446 = vmatpush1.bf16.msra.mxu0 0
    %447 = vmatprep.subr.bf16.mxu0 0
    %448 = vmatpush1.bf16.msra.mxu0 0
    %449 = vmatprep.subr.bf16.mxu0 0
    %450 = vmatpush1.bf16.msra.mxu0 0
    %451 = vmatprep.subr.bf16.mxu0 0
    %452 = vmatpush1.bf16.msra.mxu0 0
    %453 = vmatprep.subr.bf16.mxu0 0
    %454 = vmatpush1.bf16.msra.mxu0 0
    %455 = vmatprep.subr.bf16.mxu0 0
    %456 = vmatpush1.bf16.msra.mxu0 0
    %457 = vmatprep.subr.bf16.mxu0 0
    %458 = vmatpush1.bf16.msra.mxu0 %v438
    %459 = vmatprep.subr.bf16.mxu0 0
    %460 = vmatpush1.bf16.msra.mxu0 %v437
    %461 = vmatprep.subr.bf16.mxu0 0
    %462 = vmatpush2.bf16.msra.mxu0 0
    %463 = vmatprep.subr.bf16.mxu0 0
    %464 = vmatpush2.bf16.msra.mxu0 0
    %465 = vmatprep.subr.bf16.mxu0 0
    %466 = vmatpush2.bf16.msra.mxu0 0
    %467 = vmatprep.subr.bf16.mxu0 0
    %468 = vmatpush2.bf16.msra.mxu0 0
    %469 = vmatprep.subr.bf16.mxu0 0
    %470 = vmatpush2.bf16.msra.mxu0 0
    %471 = vmatprep.subr.bf16.mxu0 0
    %472 = vmatpush2.bf16.msra.mxu0 0
    %473 = vmatprep.subr.bf16.mxu0 0
    %474 = vmatpush2.bf16.msra.mxu0 0
    %475 = vmatprep.subr.bf16.mxu0 0
    %476 = vmatpush2.bf16.msra.mxu0 0
    %477 = vmatprep.mubr.bf16.mxu0 0
    %478 = vmatmul.mubr.bf16.gmra.mxu0 %v383
    %v479 = vpop.f32.mrf.mxu0
    %v480 = vadd.f32 %v443, %v479
    %v481 = vpop.f32.mrf.mxu0
    %v482 = vpop.f32.mrf.mxu0
    %v483 = vadd.f32 %v443, %v482
    %v484 = vpop.f32.mrf.mxu0
    %485 = vmatprep.mubr.bf16.mxu0 0
    %486 = vmatmul.mubr.bf16.gmra.mxu0 %v386
    %v487 = vpop.f32.mrf.mxu0
    %v488 = vadd.f32 %v443, %v487
    %v489 = vpop.f32.mrf.mxu0
    %v490 = vpop.f32.mrf.mxu0
    %v491 = vadd.f32 %v443, %v490
    %v492 = vpop.f32.mrf.mxu0
    %493 = vdwg.mxu0
    %v494 = vlaneseq
    %v495 = vand.u32 %v494, 127
    %vm496 = vcmp.ge.s32.totalorder %v495, 0
    %vm497 = vcmp.ge.s32.totalorder %v495, 8
    %vm498 = vcmp.ge.s32.totalorder %v495, 16
    %vm499 = vcmp.ge.s32.totalorder %v495, 24
    %vm500 = vcmp.lt.s32.totalorder %v495, 8
    %vm501 = vcmp.lt.s32.totalorder %v495, 16
    %vm502 = vcmp.lt.s32.totalorder %v495, 24
    %vm503 = vcmp.lt.s32.totalorder %v495, 32
    %vm504 = vmand %vm496, %vm500
    %vm505 = vmand %vm497, %vm501
    %vm506 = vmand %vm498, %vm502
    %vm507 = vmand %vm499, %vm503
    %v508 = vsel %vm504, 1, 0
    %v509 = vsel %vm505, 1, 0
    %v510 = vsel %vm506, 1, 0
    %v511 = vsel %vm507, 1, 0
    %v512 = vcvt.s32.f32 %v508
    %v513 = vcvt.s32.f32 %v509
    %v514 = vcvt.s32.f32 %v510
    %v515 = vcvt.s32.f32 %v511
    %v516 = vmul.f32 %v423, %v512
    %v517 = vmul.f32 %v426, %v512
    %v518 = vmul.f32 %v423, %v513
    %v519 = vmul.f32 %v426, %v513
    %v520 = vmul.f32 %v423, %v514
    %v521 = vmul.f32 %v426, %v514
    %v522 = vmul.f32 %v423, %v515
    %v523 = vmul.f32 %v426, %v515
    %v524 = vmul.f32 %v431, %v512
    %v525 = vmul.f32 %v434, %v512
    %v526 = vmul.f32 %v431, %v513
    %v527 = vmul.f32 %v434, %v513
    %v528 = vmul.f32 %v431, %v514
    %v529 = vmul.f32 %v434, %v514
    %v530 = vmul.f32 %v431, %v515
    %v531 = vmul.f32 %v434, %v515
    %v532 = vmul.f32 %v480, %v512
    %v533 = vmul.f32 %v483, %v512
    %v534 = vmul.f32 %v480, %v513
    %v535 = vmul.f32 %v483, %v513
    %v536 = vmul.f32 %v480, %v514
    %v537 = vmul.f32 %v483, %v514
    %v538 = vmul.f32 %v480, %v515
    %v539 = vmul.f32 %v483, %v515
    %v540 = vmul.f32 %v488, %v512
    %v541 = vmul.f32 %v491, %v512
    %v542 = vmul.f32 %v488, %v513
    %v543 = vmul.f32 %v491, %v513
    %v544 = vmul.f32 %v488, %v514
    %v545 = vmul.f32 %v491, %v514
    %v546 = vmul.f32 %v488, %v515
    %v547 = vmul.f32 %v491, %v515
    %v548 = vpack.c.bf16 %v370, %v370
    %v549 = vpack.c.bf16 %v371, %v371
    %v550 = vpack.c.bf16 %v517, %v516
    %v551 = vpack.c.bf16 %v519, %v518
    %v552 = vpack.c.bf16 %v521, %v520
    %v553 = vpack.c.bf16 %v523, %v522
    %v554 = vpack.c.bf16 %v525, %v524
    %v555 = vpack.c.bf16 %v527, %v526
    %v556 = vpack.c.bf16 %v529, %v528
    %v557 = vpack.c.bf16 %v531, %v530
    %v559 = vsel %vm325, %v548, 0
    %v562 = vsel %vm325, %v550, 0
    %v565 = vsel %vm325, %v551, 0
    %v568 = vsel %vm325, %v552, 0
    %v571 = vsel %vm325, %v553, 0
    %573 = vmatprep.subr.bf16.mxu0 0
    %574 = vmatpush1.bf16.xpose.msra.mxu0 0
    %575 = vmatprep.subr.bf16.mxu0 0
    %576 = vmatpush1.bf16.xpose.msra.mxu0 0
    %577 = vmatprep.subr.bf16.mxu0 0
    %578 = vmatpush1.bf16.xpose.msra.mxu0 0
    %579 = vmatprep.subr.bf16.mxu0 0
    %580 = vmatpush1.bf16.xpose.msra.mxu0 0
    %581 = vmatprep.subr.bf16.mxu0 0
    %582 = vmatpush1.bf16.xpose.msra.mxu0 %v571
    %583 = vmatprep.subr.bf16.mxu0 0
    %584 = vmatpush1.bf16.xpose.msra.mxu0 %v568
    %585 = vmatprep.subr.bf16.mxu0 0
    %586 = vmatpush1.bf16.xpose.msra.mxu0 %v565
    %587 = vmatprep.subr.bf16.mxu0 0
    %588 = vmatpush1.bf16.xpose.msra.mxu0 %v562
    %589 = vmatprep.subr.bf16.mxu0 0
    %590 = vmatpush2.bf16.xpose.msra.mxu0 0
    %591 = vmatprep.subr.bf16.mxu0 0
    %592 = vmatpush2.bf16.xpose.msra.mxu0 0
    %593 = vmatprep.subr.bf16.mxu0 0
    %594 = vmatpush2.bf16.xpose.msra.mxu0 0
    %595 = vmatprep.subr.bf16.mxu0 0
    %596 = vmatpush2.bf16.xpose.msra.mxu0 0
    %597 = vmatprep.subr.bf16.mxu0 0
    %598 = vmatpush2.bf16.xpose.msra.mxu0 0
    %599 = vmatprep.subr.bf16.mxu0 0
    %600 = vmatpush2.bf16.xpose.msra.mxu0 0
    %601 = vmatprep.subr.bf16.mxu0 0
    %602 = vmatpush2.bf16.xpose.msra.mxu0 0
    %603 = vmatprep.subr.bf16.mxu0 0
    %604 = vmatpush2.bf16.xpose.msra.mxu0 0
    %605 = vmatprep.mubr.bf16.mxu0 0
    %606 = vmatmul.mubr.bf16.gmra.mxu0 %v559
    %v607 = vpop.f32.mrf.mxu0
    %v608 = vadd.f32 0.0, %v607
    %v609 = vpop.f32.mrf.mxu0
    %v610 = vpop.f32.mrf.mxu0
    %v611 = vpop.f32.mrf.mxu0
    %612 = vdwg.mxu0
    %v614 = vsel %vm325, %v549, 0
    %v617 = vsel %vm325, %v554, 0
    %v620 = vsel %vm325, %v555, 0
    %v623 = vsel %vm325, %v556, 0
    %v626 = vsel %vm325, %v557, 0
    %628 = vmatprep.subr.bf16.mxu0 0
    %629 = vmatpush1.bf16.xpose.msra.mxu0 0
    %630 = vmatprep.subr.bf16.mxu0 0
    %631 = vmatpush1.bf16.xpose.msra.mxu0 0
    %632 = vmatprep.subr.bf16.mxu0 0
    %633 = vmatpush1.bf16.xpose.msra.mxu0 0
    %634 = vmatprep.subr.bf16.mxu0 0
    %635 = vmatpush1.bf16.xpose.msra.mxu0 0
    %636 = vmatprep.subr.bf16.mxu0 0
    %637 = vmatpush1.bf16.xpose.msra.mxu0 %v626
    %638 = vmatprep.subr.bf16.mxu0 0
    %639 = vmatpush1.bf16.xpose.msra.mxu0 %v623
    %640 = vmatprep.subr.bf16.mxu0 0
    %641 = vmatpush1.bf16.xpose.msra.mxu0 %v620
    %642 = vmatprep.subr.bf16.mxu0 0
    %643 = vmatpush1.bf16.xpose.msra.mxu0 %v617
    %644 = vmatprep.subr.bf16.mxu0 0
    %645 = vmatpush2.bf16.xpose.msra.mxu0 0
    %646 = vmatprep.subr.bf16.mxu0 0
    %647 = vmatpush2.bf16.xpose.msra.mxu0 0
    %648 = vmatprep.subr.bf16.mxu0 0
    %649 = vmatpush2.bf16.xpose.msra.mxu0 0
    %650 = vmatprep.subr.bf16.mxu0 0
    %651 = vmatpush2.bf16.xpose.msra.mxu0 0
    %652 = vmatprep.subr.bf16.mxu0 0
    %653 = vmatpush2.bf16.xpose.msra.mxu0 0
    %654 = vmatprep.subr.bf16.mxu0 0
    %655 = vmatpush2.bf16.xpose.msra.mxu0 0
    %656 = vmatprep.subr.bf16.mxu0 0
    %657 = vmatpush2.bf16.xpose.msra.mxu0 0
    %658 = vmatprep.subr.bf16.mxu0 0
    %659 = vmatpush2.bf16.xpose.msra.mxu0 0
    %660 = vmatprep.mubr.bf16.mxu0 0
    %661 = vmatmul.mubr.bf16.gmra.mxu0 %v614
    %v662 = vpop.f32.mrf.mxu0
    %v663 = vadd.f32 0.0, %v662
    %v664 = vpop.f32.mrf.mxu0
    %v665 = vpop.f32.mrf.mxu0
    %v666 = vpop.f32.mrf.mxu0
    %667 = vdwg.mxu0
    %vm668 = vcmask 523264
    %v669 = vsel %vm668, %v608, -inf
    %670 = vmax.xlane.f32.xlu0 %v669
    %v671 = vpop.xlane.xlu0 %670
    %v672 = vsel %vm668, %v663, -inf
    %673 = vmax.xlane.f32.xlu0 %v672
    %v674 = vpop.xlane.xlu0 %673
    %v675 = vsub.f32 %v608, %v671
    %v676 = vsub.f32 %v663, %v674
    %v677 = vmul.f32 %v675, 1.442695
    %v678 = vpow.pop %v677
    %v679 = vmul.f32 %v676, 1.442695
    %v680 = vpow.pop %v679
    %v681 = vlaneseq
    %v682 = vshrl.u32 %v681, 7
    %v683 = vadd.s32 %v682, 8
    %v684 = vadd.s32 %v682, 16
    %v685 = vadd.s32 %v682, 24
    %v686 = vadd.s32 %v682, 32
    %v687 = vadd.s32 %v682, 40
    %v688 = vadd.s32 %v682, 48
    %v689 = vadd.s32 %v682, 56
    %v690 = vmul.u32 %v495, 16
    %vm691 = vcmp.ge.s32.totalorder %v682, %v690
    %vm692 = vcmp.ge.s32.totalorder %v683, %v690
    %vm693 = vcmp.ge.s32.totalorder %v684, %v690
    %vm694 = vcmp.ge.s32.totalorder %v685, %v690
    %vm695 = vcmp.ge.s32.totalorder %v686, %v690
    %vm696 = vcmp.ge.s32.totalorder %v687, %v690
    %vm697 = vcmp.ge.s32.totalorder %v688, %v690
    %vm698 = vcmp.ge.s32.totalorder %v689, %v690
    %v699 = vadd.s32 %v495, 1
    %v700 = vmul.u32 %v699, 16
    %vm701 = vcmp.lt.s32.totalorder %v682, %v700
    %vm702 = vcmp.lt.s32.totalorder %v683, %v700
    %vm703 = vcmp.lt.s32.totalorder %v684, %v700
    %vm704 = vcmp.lt.s32.totalorder %v685, %v700
    %vm705 = vcmp.lt.s32.totalorder %v686, %v700
    %vm706 = vcmp.lt.s32.totalorder %v687, %v700
    %vm707 = vcmp.lt.s32.totalorder %v688, %v700
    %vm708 = vcmp.lt.s32.totalorder %v689, %v700
    %vm709 = vmand %vm691, %vm701
    %vm710 = vmand %vm692, %vm702
    %vm711 = vmand %vm693, %vm703
    %vm712 = vmand %vm694, %vm704
    %vm713 = vmand %vm695, %vm705
    %vm714 = vmand %vm696, %vm706
    %vm715 = vmand %vm697, %vm707
    %vm716 = vmand %vm698, %vm708
    %v717 = vsel %vm709, 1, 0
    %v718 = vsel %vm710, 1, 0
    %v719 = vsel %vm711, 1, 0
    %v720 = vsel %vm712, 1, 0
    %v721 = vsel %vm713, 1, 0
    %v722 = vsel %vm714, 1, 0
    %v723 = vsel %vm715, 1, 0
    %v724 = vsel %vm716, 1, 0
    %v725 = vcvt.s32.f32 %v717
    %v726 = vcvt.s32.f32 %v718
    %v727 = vcvt.s32.f32 %v719
    %v728 = vcvt.s32.f32 %v720
    %v729 = vcvt.s32.f32 %v721
    %v730 = vcvt.s32.f32 %v722
    %v731 = vcvt.s32.f32 %v723
    %v732 = vcvt.s32.f32 %v724
    %v733 = vmul.u32 %v682, 16
    %vm734 = vcmp.ge.s32.totalorder %v495, %v733
    %v735 = vadd.s32 %v682, 1
    %v736 = vmul.u32 %v735, 16
    %vm737 = vcmp.lt.s32.totalorder %v495, %v736
    %vm738 = vmand %vm734, %vm737
    %v739 = vsel %vm738, 1, 0
    %v740 = vcvt.s32.f32 %v739
    %v742 = vsel %vm668, %v678, 0
    %v745 = vsel %vm668, %v680, 0
    %747 = vmatprep.subr.mxu0 0.0
    %748 = vmatpush1.msra.mxu0 0.0
    %749 = vmatprep.subr.mxu0 0.0
    %750 = vmatpush1.msra.mxu0 0.0
    %751 = vmatprep.subr.mxu0 0.0
    %752 = vmatpush1.msra.mxu0 0.0
    %753 = vmatprep.subr.mxu0 0.0
    %754 = vmatpush1.msra.mxu0 0.0
    %755 = vmatprep.subr.mxu0 0.0
    %756 = vmatpush1.msra.mxu0 0.0
    %757 = vmatprep.subr.mxu0 0.0
    %758 = vmatpush1.msra.mxu0 0.0
    %759 = vmatprep.subr.mxu0 0.0
    %760 = vmatpush1.msra.mxu0 0.0
    %761 = vmatprep.subr.mxu0 0.0
    %762 = vmatpush1.msra.mxu0 0.0
    %763 = vmatprep.subr.mxu0 0.0
    %764 = vmatpush1.msra.mxu0 %v732
    %765 = vmatprep.subr.mxu0 0.0
    %766 = vmatpush1.msra.mxu0 %v731
    %767 = vmatprep.subr.mxu0 0.0
    %768 = vmatpush1.msra.mxu0 %v730
    %769 = vmatprep.subr.mxu0 0.0
    %770 = vmatpush1.msra.mxu0 %v729
    %771 = vmatprep.subr.mxu0 0.0
    %772 = vmatpush1.msra.mxu0 %v728
    %773 = vmatprep.subr.mxu0 0.0
    %774 = vmatpush1.msra.mxu0 %v727
    %775 = vmatprep.subr.mxu0 0.0
    %776 = vmatpush1.msra.mxu0 %v726
    %777 = vmatprep.subr.mxu0 0.0
    %778 = vmatpush1.msra.mxu0 %v725
    %779 = vmatprep.subr.mxu0 0.0
    %780 = vmatpush2.msra.mxu0 0.0
    %781 = vmatprep.subr.mxu0 0.0
    %782 = vmatpush2.msra.mxu0 0.0
    %783 = vmatprep.subr.mxu0 0.0
    %784 = vmatpush2.msra.mxu0 0.0
    %785 = vmatprep.subr.mxu0 0.0
    %786 = vmatpush2.msra.mxu0 0.0
    %787 = vmatprep.subr.mxu0 0.0
    %788 = vmatpush2.msra.mxu0 0.0
    %789 = vmatprep.subr.mxu0 0.0
    %790 = vmatpush2.msra.mxu0 0.0
    %791 = vmatprep.subr.mxu0 0.0
    %792 = vmatpush2.msra.mxu0 0.0
    %793 = vmatprep.subr.mxu0 0.0
    %794 = vmatpush2.msra.mxu0 0.0
    %795 = vmatprep.subr.mxu0 0.0
    %796 = vmatpush2.msra.mxu0 0.0
    %797 = vmatprep.subr.mxu0 0.0
    %798 = vmatpush2.msra.mxu0 0.0
    %799 = vmatprep.subr.mxu0 0.0
    %800 = vmatpush2.msra.mxu0 0.0
    %801 = vmatprep.subr.mxu0 0.0
    %802 = vmatpush2.msra.mxu0 0.0
    %803 = vmatprep.subr.mxu0 0.0
    %804 = vmatpush2.msra.mxu0 0.0
    %805 = vmatprep.subr.mxu0 0.0
    %806 = vmatpush2.msra.mxu0 0.0
    %807 = vmatprep.subr.mxu0 0.0
    %808 = vmatpush2.msra.mxu0 0.0
    %809 = vmatprep.subr.mxu0 0.0
    %810 = vmatpush2.msra.mxu0 0.0
    %811 = vmatprep.mubr.f32.mxu0 0.0
    %812 = vmatmul.mubr.f32.gmra.mxu0 %v742
    %v813 = vpop.f32.mrf.mxu0
    %v814 = vadd.f32 0.0, %v813
    %v815 = vpop.f32.mrf.mxu0
    %816 = vmatprep.mubr.f32.mxu0 0.0
    %817 = vmatmul.mubr.f32.gmra.mxu0 %v745
    %v818 = vpop.f32.mrf.mxu0
    %v819 = vadd.f32 0.0, %v818
    %v820 = vpop.f32.mrf.mxu0
    %821 = vdwg.mxu0
    %v822 = vrcp.pop %v814
    %v823 = vrcp.pop %v819
    %vm824 = vcmask 31744
    %v826 = vsel %vm824, %v822, 0
    %v829 = vsel %vm824, %v823, 0
    %vm831 = vcmask 1043456
    %v833 = vsel %vm831, %v740, 0
    %835 = vmatprep.subr.mxu0 0.0
    %836 = vmatpush1.msra.mxu0 0.0
    %837 = vmatprep.subr.mxu0 0.0
    %838 = vmatpush1.msra.mxu0 0.0
    %839 = vmatprep.subr.mxu0 0.0
    %840 = vmatpush1.msra.mxu0 0.0
    %841 = vmatprep.subr.mxu0 0.0
    %842 = vmatpush1.msra.mxu0 0.0
    %843 = vmatprep.subr.mxu0 0.0
    %844 = vmatpush1.msra.mxu0 0.0
    %845 = vmatprep.subr.mxu0 0.0
    %846 = vmatpush1.msra.mxu0 0.0
    %847 = vmatprep.subr.mxu0 0.0
    %848 = vmatpush1.msra.mxu0 0.0
    %849 = vmatprep.subr.mxu0 0.0
    %850 = vmatpush1.msra.mxu0 0.0
    %851 = vmatprep.subr.mxu0 0.0
    %852 = vmatpush1.msra.mxu0 0.0
    %853 = vmatprep.subr.mxu0 0.0
    %854 = vmatpush1.msra.mxu0 0.0
    %855 = vmatprep.subr.mxu0 0.0
    %856 = vmatpush1.msra.mxu0 0.0
    %857 = vmatprep.subr.mxu0 0.0
    %858 = vmatpush1.msra.mxu0 0.0
    %859 = vmatprep.subr.mxu0 0.0
    %860 = vmatpush1.msra.mxu0 0.0
    %861 = vmatprep.subr.mxu0 0.0
    %862 = vmatpush1.msra.mxu0 0.0
    %863 = vmatprep.subr.mxu0 0.0
    %864 = vmatpush1.msra.mxu0 0.0
    %865 = vmatprep.subr.mxu0 0.0
    %866 = vmatpush1.msra.mxu0 %v833
    %867 = vmatprep.subr.mxu0 0.0
    %868 = vmatpush2.msra.mxu0 0.0
    %869 = vmatprep.subr.mxu0 0.0
    %870 = vmatpush2.msra.mxu0 0.0
    %871 = vmatprep.subr.mxu0 0.0
    %872 = vmatpush2.msra.mxu0 0.0
    %873 = vmatprep.subr.mxu0 0.0
    %874 = vmatpush2.msra.mxu0 0.0
    %875 = vmatprep.subr.mxu0 0.0
    %876 = vmatpush2.msra.mxu0 0.0
    %877 = vmatprep.subr.mxu0 0.0
    %878 = vmatpush2.msra.mxu0 0.0
    %879 = vmatprep.subr.mxu0 0.0
    %880 = vmatpush2.msra.mxu0 0.0
    %881 = vmatprep.subr.mxu0 0.0
    %882 = vmatpush2.msra.mxu0 0.0
    %883 = vmatprep.subr.mxu0 0.0
    %884 = vmatpush2.msra.mxu0 0.0
    %885 = vmatprep.subr.mxu0 0.0
    %886 = vmatpush2.msra.mxu0 0.0
    %887 = vmatprep.subr.mxu0 0.0
    %888 = vmatpush2.msra.mxu0 0.0
    %889 = vmatprep.subr.mxu0 0.0
    %890 = vmatpush2.msra.mxu0 0.0
    %891 = vmatprep.subr.mxu0 0.0
    %892 = vmatpush2.msra.mxu0 0.0
    %893 = vmatprep.subr.mxu0 0.0
    %894 = vmatpush2.msra.mxu0 0.0
    %895 = vmatprep.subr.mxu0 0.0
    %896 = vmatpush2.msra.mxu0 0.0
    %897 = vmatprep.subr.mxu0 0.0
    %898 = vmatpush2.msra.mxu0 0.0
    %899 = vmatprep.mubr.f32.mxu0 0.0
    %900 = vmatmul.mubr.f32.gmra.mxu0 %v826
    %v901 = vpop.f32.mrf.mxu0
    %v902 = vadd.f32 0.0, %v901
    %v903 = vpop.f32.mrf.mxu0
    %904 = vmatprep.mubr.f32.mxu0 0.0
    %905 = vmatmul.mubr.f32.gmra.mxu0 %v829
    %v906 = vpop.f32.mrf.mxu0
    %v907 = vadd.f32 0.0, %v906
    %v908 = vpop.f32.mrf.mxu0
    %909 = vdwg.mxu0
    %v910 = vmul.f32 %v678, %v902
    %v911 = vmul.f32 %v680, %v907
    %v912 = vpack.c.bf16 %v910, %v910
    %v913 = vpack.c.bf16 %v911, %v911
    %v914 = vpack.c.bf16 %v533, %v532
    %v915 = vpack.c.bf16 %v535, %v534
    %v916 = vpack.c.bf16 %v537, %v536
    %v917 = vpack.c.bf16 %v539, %v538
    %v918 = vpack.c.bf16 %v541, %v540
    %v919 = vpack.c.bf16 %v543, %v542
    %v920 = vpack.c.bf16 %v545, %v544
    %v921 = vpack.c.bf16 %v547, %v546
    %v923 = vsel %vm668, %v912, 0
    %925 = vmatprep.subr.bf16.mxu0 0
    %926 = vmatpush1.bf16.msra.mxu0 0
    %927 = vmatprep.subr.bf16.mxu0 0
    %928 = vmatpush1.bf16.msra.mxu0 0
    %929 = vmatprep.subr.bf16.mxu0 0
    %930 = vmatpush1.bf16.msra.mxu0 0
    %931 = vmatprep.subr.bf16.mxu0 0
    %932 = vmatpush1.bf16.msra.mxu0 0
    %933 = vmatprep.subr.bf16.mxu0 0
    %934 = vmatpush1.bf16.msra.mxu0 %v917
    %935 = vmatprep.subr.bf16.mxu0 0
    %936 = vmatpush1.bf16.msra.mxu0 %v916
    %937 = vmatprep.subr.bf16.mxu0 0
    %938 = vmatpush1.bf16.msra.mxu0 %v915
    %939 = vmatprep.subr.bf16.mxu0 0
    %940 = vmatpush1.bf16.msra.mxu0 %v914
    %941 = vmatprep.subr.bf16.mxu0 0
    %942 = vmatpush2.bf16.msra.mxu0 0
    %943 = vmatprep.subr.bf16.mxu0 0
    %944 = vmatpush2.bf16.msra.mxu0 0
    %945 = vmatprep.subr.bf16.mxu0 0
    %946 = vmatpush2.bf16.msra.mxu0 0
    %947 = vmatprep.subr.bf16.mxu0 0
    %948 = vmatpush2.bf16.msra.mxu0 0
    %949 = vmatprep.subr.bf16.mxu0 0
    %950 = vmatpush2.bf16.msra.mxu0 0
    %951 = vmatprep.subr.bf16.mxu0 0
    %952 = vmatpush2.bf16.msra.mxu0 0
    %953 = vmatprep.subr.bf16.mxu0 0
    %954 = vmatpush2.bf16.msra.mxu0 0
    %955 = vmatprep.subr.bf16.mxu0 0
    %956 = vmatpush2.bf16.msra.mxu0 0
    %957 = vmatprep.mubr.bf16.mxu0 0
    %958 = vmatmul.mubr.bf16.gmra.mxu0 %v923
    %v959 = vpop.f32.mrf.mxu0
    %v960 = vadd.f32 0.0, %v959
    %v961 = vpop.f32.mrf.mxu0
    %v962 = vpop.f32.mrf.mxu0
    %v963 = vpop.f32.mrf.mxu0
    %964 = vdwg.mxu0
    %v966 = vsel %vm668, %v913, 0
    %968 = vmatprep.subr.bf16.mxu0 0
    %969 = vmatpush1.bf16.msra.mxu0 0
    %970 = vmatprep.subr.bf16.mxu0 0
    %971 = vmatpush1.bf16.msra.mxu0 0
    %972 = vmatprep.subr.bf16.mxu0 0
    %973 = vmatpush1.bf16.msra.mxu0 0
    %974 = vmatprep.subr.bf16.mxu0 0
    %975 = vmatpush1.bf16.msra.mxu0 0
    %976 = vmatprep.subr.bf16.mxu0 0
    %977 = vmatpush1.bf16.msra.mxu0 %v921
    %978 = vmatprep.subr.bf16.mxu0 0
    %979 = vmatpush1.bf16.msra.mxu0 %v920
    %980 = vmatprep.subr.bf16.mxu0 0
    %981 = vmatpush1.bf16.msra.mxu0 %v919
    %982 = vmatprep.subr.bf16.mxu0 0
    %983 = vmatpush1.bf16.msra.mxu0 %v918
    %984 = vmatprep.subr.bf16.mxu0 0
    %985 = vmatpush2.bf16.msra.mxu0 0
    %986 = vmatprep.subr.bf16.mxu0 0
    %987 = vmatpush2.bf16.msra.mxu0 0
    %988 = vmatprep.subr.bf16.mxu0 0
    %989 = vmatpush2.bf16.msra.mxu0 0
    %990 = vmatprep.subr.bf16.mxu0 0
    %991 = vmatpush2.bf16.msra.mxu0 0
    %992 = vmatprep.subr.bf16.mxu0 0
    %993 = vmatpush2.bf16.msra.mxu0 0
    %994 = vmatprep.subr.bf16.mxu0 0
    %995 = vmatpush2.bf16.msra.mxu0 0
    %996 = vmatprep.subr.bf16.mxu0 0
    %997 = vmatpush2.bf16.msra.mxu0 0
    %998 = vmatprep.subr.bf16.mxu0 0
    %999 = vmatpush2.bf16.msra.mxu0 0
    %1000 = vmatprep.mubr.bf16.mxu0 0
    %1001 = vmatmul.mubr.bf16.gmra.mxu0 %v966
    %v1002 = vpop.f32.mrf.mxu0
    %v1003 = vadd.f32 0.0, %v1002
    %v1004 = vpop.f32.mrf.mxu0
    %v1005 = vpop.f32.mrf.mxu0
    %v1006 = vpop.f32.mrf.mxu0
    %1007 = vdwg.mxu0
    %v1008 = vpack.c.bf16 %v1003, %v960
    %v1009 = vpack.c.bf16 %v264, %v263
    %v1010 = vpack.c.bf16 %v266, %v265
    %v1012 = vlaneseq
    %v1013 = vshrl.u32 %v1012, 7
    %v1014 = vsub.s32 0, %v1013
    %v1015 = vrot.slane %v267, %v1014
    %v1018 = vsel %vm325, %v1008, 0
    %1020 = vmatprep.subr.bf16.mxu0 0
    %1021 = vmatpush1.bf16.msra.mxu0 0
    %1022 = vmatprep.subr.bf16.mxu0 0
    %1023 = vmatpush1.bf16.msra.mxu0 0
    %1024 = vmatprep.subr.bf16.mxu0 0
    %1025 = vmatpush1.bf16.msra.mxu0 0
    %1026 = vmatprep.subr.bf16.mxu0 0
    %1027 = vmatpush1.bf16.msra.mxu0 0
    %1028 = vmatprep.subr.bf16.mxu0 0
    %1029 = vmatpush1.bf16.msra.mxu0 0
    %1030 = vmatprep.subr.bf16.mxu0 0
    %1031 = vmatpush1.bf16.msra.mxu0 0
    %1032 = vmatprep.subr.bf16.mxu0 0
    %1033 = vmatpush1.bf16.msra.mxu0 %v1010
    %1034 = vmatprep.subr.bf16.mxu0 0
    %1035 = vmatpush1.bf16.msra.mxu0 %v1009
    %1036 = vmatprep.subr.bf16.mxu0 0
    %1037 = vmatpush2.bf16.msra.mxu0 0
    %1038 = vmatprep.subr.bf16.mxu0 0
    %1039 = vmatpush2.bf16.msra.mxu0 0
    %1040 = vmatprep.subr.bf16.mxu0 0
    %1041 = vmatpush2.bf16.msra.mxu0 0
    %1042 = vmatprep.subr.bf16.mxu0 0
    %1043 = vmatpush2.bf16.msra.mxu0 0
    %1044 = vmatprep.subr.bf16.mxu0 0
    %1045 = vmatpush2.bf16.msra.mxu0 0
    %1046 = vmatprep.subr.bf16.mxu0 0
    %1047 = vmatpush2.bf16.msra.mxu0 0
    %1048 = vmatprep.subr.bf16.mxu0 0
    %1049 = vmatpush2.bf16.msra.mxu0 0
    %1050 = vmatprep.subr.bf16.mxu0 0
    %1051 = vmatpush2.bf16.msra.mxu0 0
    %1052 = vmatprep.mubr.bf16.mxu0 0
    %1053 = vmatmul.mubr.bf16.gmra.mxu0 %v1018
    %v1054 = vpop.f32.mrf.mxu0
    %v1055 = vadd.f32 %v1015, %v1054
    %v1056 = vpop.f32.mrf.mxu0
    %v1057 = vpop.f32.mrf.mxu0
    %v1058 = vadd.f32 %v1015, %v1057
    %v1059 = vpop.f32.mrf.mxu0
    %1060 = vdwg.mxu0
    %v1061 = vadd.f32 %v242, %v1055
    %v1062 = vadd.f32 %v243, %v1058
    %v1063 = vsel %vm325, %v1061, 0.0
    %1064 = vadd.xlane.f32.xlu0 %v1063
    %v1065 = vpop.xlane.xlu0 %1064
    %v1066 = vsel %vm325, %v1062, 0.0
    %1067 = vadd.xlane.f32.xlu0 %v1066
    %v1068 = vpop.xlane.xlu0 %1067
    %v1069 = vrcp.pop 32.0
    %v1070 = vmul.f32 %v1065, %v1069
    %v1071 = vmul.f32 %v1068, %v1069
    %v1072 = vsub.f32 %v1061, %v1070
    %v1073 = vsub.f32 %v1062, %v1071
    %v1074 = vmul.f32 %v1072, %v1072
    %v1075 = vmul.f32 %v1073, %v1073
    %v1076 = vsel %vm325, %v1074, 0.0
    %1077 = vadd.xlane.f32.xlu0 %v1076
    %v1078 = vpop.xlane.xlu0 %1077
    %v1079 = vsel %vm325, %v1075, 0.0
    %1080 = vadd.xlane.f32.xlu0 %v1079
    %v1081 = vpop.xlane.xlu0 %1080
    %v1082 = vmul.f32 %v1078, %v1069
    %v1083 = vmul.f32 %v1081, %v1069
    %v1084 = vadd.f32 %v1082, 1e-05
    %v1085 = vadd.f32 %v1083, 1e-05
    %v1086 = vrsqrt.pop %v1084
    %v1087 = vrsqrt.pop %v1085
    %v1088 = vmul.f32 %v1072, %v1086
    %v1089 = vmul.f32 %v1073, %v1087
    %v1091 = vlaneseq
    %v1092 = vshrl.u32 %v1091, 7
    %v1093 = vsub.s32 0, %v1092
    %v1094 = vrot.slane %v310, %v1093
    %v1096 = vmul.f32 %v1088, %v1094
    %v1097 = vmul.f32 %v1089, %v1094
    %v1099 = vlaneseq
    %v1100 = vshrl.u32 %v1099, 7
    %v1101 = vsub.s32 0, %v1100
    %v1102 = vrot.slane %v311, %v1101
    %v1104 = vadd.f32 %v1096, %v1102
    %v1105 = vadd.f32 %v1097, %v1102
    %v1106 = vpack.c.bf16 %v1105, %v1104
    %v1107 = vpack.c.bf16 %v269, %v268
    %v1108 = vpack.c.bf16 %v271, %v270
    %v1110 = vlaneseq
    %v1111 = vshrl.u32 %v1110, 7
    %v1112 = vsub.s32 0, %v1111
    %v1113 = vrot.slane %v272, %v1112
    %v1116 = vsel %vm325, %v1106, 0
    %1118 = vmatprep.subr.bf16.mxu0 0
    %1119 = vmatpush1.bf16.msra.mxu0 0
    %1120 = vmatprep.subr.bf16.mxu0 0
    %1121 = vmatpush1.bf16.msra.mxu0 0
    %1122 = vmatprep.subr.bf16.mxu0 0
    %1123 = vmatpush1.bf16.msra.mxu0 0
    %1124 = vmatprep.subr.bf16.mxu0 0
    %1125 = vmatpush1.bf16.msra.mxu0 0
    %1126 = vmatprep.subr.bf16.mxu0 0
    %1127 = vmatpush1.bf16.msra.mxu0 0
    %1128 = vmatprep.subr.bf16.mxu0 0
    %1129 = vmatpush1.bf16.msra.mxu0 0
    %1130 = vmatprep.subr.bf16.mxu0 0
    %1131 = vmatpush1.bf16.msra.mxu0 %v1108
    %1132 = vmatprep.subr.bf16.mxu0 0
    %1133 = vmatpush1.bf16.msra.mxu0 %v1107
    %1134 = vmatprep.subr.bf16.mxu0 0
    %1135 = vmatpush2.bf16.msra.mxu0 0
    %1136 = vmatprep.subr.bf16.mxu0 0
    %1137 = vmatpush2.bf16.msra.mxu0 0
    %1138 = vmatprep.subr.bf16.mxu0 0
    %1139 = vmatpush2.bf16.msra.mxu0 0
    %1140 = vmatprep.subr.bf16.mxu0 0
    %1141 = vmatpush2.bf16.msra.mxu0 0
    %1142 = vmatprep.subr.bf16.mxu0 0
    %1143 = vmatpush2.bf16.msra.mxu0 0
    %1144 = vmatprep.subr.bf16.mxu0 0
    %1145 = vmatpush2.bf16.msra.mxu0 0
    %1146 = vmatprep.subr.bf16.mxu0 0
    %1147 = vmatpush2.bf16.msra.mxu0 0
    %1148 = vmatprep.subr.bf16.mxu0 0
    %1149 = vmatpush2.bf16.msra.mxu0 0
    %1150 = vmatprep.mubr.bf16.mxu0 0
    %1151 = vmatmul.mubr.bf16.gmra.mxu0 %v1116
    %v1152 = vpop.f32.mrf.mxu0
    %v1153 = vadd.f32 %v1113, %v1152
    %v1154 = vpop.f32.mrf.mxu0
    %v1155 = vpop.f32.mrf.mxu0
    %v1156 = vadd.f32 %v1113, %v1155
    %v1157 = vpop.f32.mrf.mxu0
    %1158 = vdwg.mxu0
    %v1159 = vmul.f32 %v1153, 0.35355338
    %v1160 = vmul.f32 %v1156, 0.35355338
    %v1161 = vpack.c.bf16 %v274, %v273
    %v1162 = vpack.c.bf16 %v276, %v275
    %v1164 = vlaneseq
    %v1165 = vshrl.u32 %v1164, 7
    %v1166 = vsub.s32 0, %v1165
    %v1167 = vrot.slane %v277, %v1166
    %1169 = vmatprep.subr.bf16.mxu0 0
    %1170 = vmatpush1.bf16.msra.mxu0 0
    %1171 = vmatprep.subr.bf16.mxu0 0
    %1172 = vmatpush1.bf16.msra.mxu0 0
    %1173 = vmatprep.subr.bf16.mxu0 0
    %1174 = vmatpush1.bf16.msra.mxu0 0
    %1175 = vmatprep.subr.bf16.mxu0 0
    %1176 = vmatpush1.bf16.msra.mxu0 0
    %1177 = vmatprep.subr.bf16.mxu0 0
    %1178 = vmatpush1.bf16.msra.mxu0 0
    %1179 = vmatprep.subr.bf16.mxu0 0
    %1180 = vmatpush1.bf16.msra.mxu0 0
    %1181 = vmatprep.subr.bf16.mxu0 0
    %1182 = vmatpush1.bf16.msra.mxu0 %v1162
    %1183 = vmatprep.subr.bf16.mxu0 0
    %1184 = vmatpush1.bf16.msra.mxu0 %v1161
    %1185 = vmatprep.subr.bf16.mxu0 0
    %1186 = vmatpush2.bf16.msra.mxu0 0
    %1187 = vmatprep.subr.bf16.mxu0 0
    %1188 = vmatpush2.bf16.msra.mxu0 0
    %1189 = vmatprep.subr.bf16.mxu0 0
    %1190 = vmatpush2.bf16.msra.mxu0 0
    %1191 = vmatprep.subr.bf16.mxu0 0
    %1192 = vmatpush2.bf16.msra.mxu0 0
    %1193 = vmatprep.subr.bf16.mxu0 0
    %1194 = vmatpush2.bf16.msra.mxu0 0
    %1195 = vmatprep.subr.bf16.mxu0 0
    %1196 = vmatpush2.bf16.msra.mxu0 0
    %1197 = vmatprep.subr.bf16.mxu0 0
    %1198 = vmatpush2.bf16.msra.mxu0 0
    %1199 = vmatprep.subr.bf16.mxu0 0
    %1200 = vmatpush2.bf16.msra.mxu0 0
    %1201 = vmatprep.mubr.bf16.mxu0 0
    %1202 = vmatmul.mubr.bf16.gmra.mxu0 %v1116
    %v1203 = vpop.f32.mrf.mxu0
    %v1204 = vadd.f32 %v1167, %v1203
    %v1205 = vpop.f32.mrf.mxu0
    %v1206 = vpop.f32.mrf.mxu0
    %v1207 = vadd.f32 %v1167, %v1206
    %v1208 = vpop.f32.mrf.mxu0
    %1209 = vdwg.mxu0
    %v1210 = vpack.c.bf16 %v279, %v278
    %v1211 = vpack.c.bf16 %v281, %v280
    %v1213 = vlaneseq
    %v1214 = vshrl.u32 %v1213, 7
    %v1215 = vsub.s32 0, %v1214
    %v1216 = vrot.slane %v282, %v1215
    %1218 = vmatprep.subr.bf16.mxu0 0
    %1219 = vmatpush1.bf16.msra.mxu0 0
    %1220 = vmatprep.subr.bf16.mxu0 0
    %1221 = vmatpush1.bf16.msra.mxu0 0
    %1222 = vmatprep.subr.bf16.mxu0 0
    %1223 = vmatpush1.bf16.msra.mxu0 0
    %1224 = vmatprep.subr.bf16.mxu0 0
    %1225 = vmatpush1.bf16.msra.mxu0 0
    %1226 = vmatprep.subr.bf16.mxu0 0
    %1227 = vmatpush1.bf16.msra.mxu0 0
    %1228 = vmatprep.subr.bf16.mxu0 0
    %1229 = vmatpush1.bf16.msra.mxu0 0
    %1230 = vmatprep.subr.bf16.mxu0 0
    %1231 = vmatpush1.bf16.msra.mxu0 %v1211
    %1232 = vmatprep.subr.bf16.mxu0 0
    %1233 = vmatpush1.bf16.msra.mxu0 %v1210
    %1234 = vmatprep.subr.bf16.mxu0 0
    %1235 = vmatpush2.bf16.msra.mxu0 0
    %1236 = vmatprep.subr.bf16.mxu0 0
    %1237 = vmatpush2.bf16.msra.mxu0 0
    %1238 = vmatprep.subr.bf16.mxu0 0
    %1239 = vmatpush2.bf16.msra.mxu0 0
    %1240 = vmatprep.subr.bf16.mxu0 0
    %1241 = vmatpush2.bf16.msra.mxu0 0
    %1242 = vmatprep.subr.bf16.mxu0 0
    %1243 = vmatpush2.bf16.msra.mxu0 0
    %1244 = vmatprep.subr.bf16.mxu0 0
    %1245 = vmatpush2.bf16.msra.mxu0 0
    %1246 = vmatprep.subr.bf16.mxu0 0
    %1247 = vmatpush2.bf16.msra.mxu0 0
    %1248 = vmatprep.subr.bf16.mxu0 0
    %1249 = vmatpush2.bf16.msra.mxu0 0
    %1250 = vmatprep.mubr.bf16.mxu0 0
    %1251 = vmatmul.mubr.bf16.gmra.mxu0 %v1116
    %v1252 = vpop.f32.mrf.mxu0
    %v1253 = vadd.f32 %v1216, %v1252
    %v1254 = vpop.f32.mrf.mxu0
    %v1255 = vpop.f32.mrf.mxu0
    %v1256 = vadd.f32 %v1216, %v1255
    %v1257 = vpop.f32.mrf.mxu0
    %1258 = vdwg.mxu0
    %v1259 = vmul.f32 %v1204, %v512
    %v1260 = vmul.f32 %v1204, %v513
    %v1261 = vmul.f32 %v1204, %v514
    %v1262 = vmul.f32 %v1204, %v515
    %v1263 = vmul.f32 %v1207, %v512
    %v1264 = vmul.f32 %v1207, %v513
    %v1265 = vmul.f32 %v1207, %v514
    %v1266 = vmul.f32 %v1207, %v515
    %v1267 = vmul.f32 %v1253, %v512
    %v1268 = vmul.f32 %v1253, %v513
    %v1269 = vmul.f32 %v1253, %v514
    %v1270 = vmul.f32 %v1253, %v515
    %v1271 = vmul.f32 %v1256, %v512
    %v1272 = vmul.f32 %v1256, %v513
    %v1273 = vmul.f32 %v1256, %v514
    %v1274 = vmul.f32 %v1256, %v515
    %v1275 = vpack.c.bf16 %v1159, %v1159
    %v1276 = vpack.c.bf16 %v1160, %v1160
    %v1277 = vpack.c.bf16 %v1260, %v1259
    %v1278 = vpack.c.bf16 %v1262, %v1261
    %v1279 = vpack.c.bf16 %v1264, %v1263
    %v1280 = vpack.c.bf16 %v1266, %v1265
    %v1282 = vsel %vm325, %v1275, 0
    %v1285 = vsel %vm325, %v1277, 0
    %v1288 = vsel %vm325, %v1278, 0
    %1290 = vmatprep.subr.bf16.mxu0 0
    %1291 = vmatpush1.bf16.xpose.msra.mxu0 0
    %1292 = vmatprep.subr.bf16.mxu0 0
    %1293 = vmatpush1.bf16.xpose.msra.mxu0 0
    %1294 = vmatprep.subr.bf16.mxu0 0
    %1295 = vmatpush1.bf16.xpose.msra.mxu0 0
    %1296 = vmatprep.subr.bf16.mxu0 0
    %1297 = vmatpush1.bf16.xpose.msra.mxu0 0
    %1298 = vmatprep.subr.bf16.mxu0 0
    %1299 = vmatpush1.bf16.xpose.msra.mxu0 0
    %1300 = vmatprep.subr.bf16.mxu0 0
    %1301 = vmatpush1.bf16.xpose.msra.mxu0 0
    %1302 = vmatprep.subr.bf16.mxu0 0
    %1303 = vmatpush1.bf16.xpose.msra.mxu0 %v1288
    %1304 = vmatprep.subr.bf16.mxu0 0
    %1305 = vmatpush1.bf16.xpose.msra.mxu0 %v1285
    %1306 = vmatprep.subr.bf16.mxu0 0
    %1307 = vmatpush2.bf16.xpose.msra.mxu0 0
    %1308 = vmatprep.subr.bf16.mxu0 0
    %1309 = vmatpush2.bf16.xpose.msra.mxu0 0
    %1310 = vmatprep.subr.bf16.mxu0 0
    %1311 = vmatpush2.bf16.xpose.msra.mxu0 0
    %1312 = vmatprep.subr.bf16.mxu0 0
    %1313 = vmatpush2.bf16.xpose.msra.mxu0 0
    %1314 = vmatprep.subr.bf16.mxu0 0
    %1315 = vmatpush2.bf16.xpose.msra.mxu0 0
    %1316 = vmatprep.subr.bf16.mxu0 0
    %1317 = vmatpush2.bf16.xpose.msra.mxu0 0
    %1318 = vmatprep.subr.bf16.mxu0 0
    %1319 = vmatpush2.bf16.xpose.msra.mxu0 0
    %1320 = vmatprep.subr.bf16.mxu0 0
    %1321 = vmatpush2.bf16.xpose.msra.mxu0 0
    %1322 = vmatprep.mubr.bf16.mxu0 0
    %1323 = vmatmul.mubr.bf16.gmra.mxu0 %v1282
    %v1324 = vpop.f32.mrf.mxu0
    %v1325 = vadd.f32 0.0, %v1324
    %v1326 = vpop.f32.mrf.mxu0
    %v1327 = vpop.f32.mrf.mxu0
    %v1328 = vpop.f32.mrf.mxu0
    %1329 = vdwg.mxu0
    %v1331 = vsel %vm325, %v1276, 0
    %v1334 = vsel %vm325, %v1279, 0
    %v1337 = vsel %vm325, %v1280, 0
    %1339 = vmatprep.subr.bf16.mxu0 0
    %1340 = vmatpush1.bf16.xpose.msra.mxu0 0
    %1341 = vmatprep.subr.bf16.mxu0 0
    %1342 = vmatpush1.bf16.xpose.msra.mxu0 0
    %1343 = vmatprep.subr.bf16.mxu0 0
    %1344 = vmatpush1.bf16.xpose.msra.mxu0 0
    %1345 = vmatprep.subr.bf16.mxu0 0
    %1346 = vmatpush1.bf16.xpose.msra.mxu0 0
    %1347 = vmatprep.subr.bf16.mxu0 0
    %1348 = vmatpush1.bf16.xpose.msra.mxu0 0
    %1349 = vmatprep.subr.bf16.mxu0 0
    %1350 = vmatpush1.bf16.xpose.msra.mxu0 0
    %1351 = vmatprep.subr.bf16.mxu0 0
    %1352 = vmatpush1.bf16.xpose.msra.mxu0 %v1337
    %1353 = vmatprep.subr.bf16.mxu0 0
    %1354 = vmatpush1.bf16.xpose.msra.mxu0 %v1334
    %1355 = vmatprep.subr.bf16.mxu0 0
    %1356 = vmatpush2.bf16.xpose.msra.mxu0 0
    %1357 = vmatprep.subr.bf16.mxu0 0
    %1358 = vmatpush2.bf16.xpose.msra.mxu0 0
    %1359 = vmatprep.subr.bf16.mxu0 0
    %1360 = vmatpush2.bf16.xpose.msra.mxu0 0
    %1361 = vmatprep.subr.bf16.mxu0 0
    %1362 = vmatpush2.bf16.xpose.msra.mxu0 0
    %1363 = vmatprep.subr.bf16.mxu0 0
    %1364 = vmatpush2.bf16.xpose.msra.mxu0 0
    %1365 = vmatprep.subr.bf16.mxu0 0
    %1366 = vmatpush2.bf16.xpose.msra.mxu0 0
    %1367 = vmatprep.subr.bf16.mxu0 0
    %1368 = vmatpush2.bf16.xpose.msra.mxu0 0
    %1369 = vmatprep.subr.bf16.mxu0 0
    %1370 = vmatpush2.bf16.xpose.msra.mxu0 0
    %1371 = vmatprep.mubr.bf16.mxu0 0
    %1372 = vmatmul.mubr.bf16.gmra.mxu0 %v1331
    %v1373 = vpop.f32.mrf.mxu0
    %v1374 = vadd.f32 0.0, %v1373
    %v1375 = vpop.f32.mrf.mxu0
    %v1376 = vpop.f32.mrf.mxu0
    %v1377 = vpop.f32.mrf.mxu0
    %1378 = vdwg.mxu0
    %v1379 = vsel %vm325, %v1325, -inf
    %1380 = vmax.xlane.f32.xlu0 %v1379
    %v1381 = vpop.xlane.xlu0 %1380
    %v1382 = vsel %vm325, %v1374, -inf
    %1383 = vmax.xlane.f32.xlu0 %v1382
    %v1384 = vpop.xlane.xlu0 %1383
    %v1385 = vsub.f32 %v1325, %v1381
    %v1386 = vsub.f32 %v1374, %v1384
    %v1387 = vmul.f32 %v1385, 1.442695
    %v1388 = vpow.pop %v1387
    %v1389 = vmul.f32 %v1386, 1.442695
    %v1390 = vpow.pop %v1389
    %v1391 = vmul.u32 %v495, 8
    %vm1392 = vcmp.ge.s32.totalorder %v682, %v1391
    %vm1393 = vcmp.ge.s32.totalorder %v683, %v1391
    %vm1394 = vcmp.ge.s32.totalorder %v684, %v1391
    %vm1395 = vcmp.ge.s32.totalorder %v685, %v1391
    %v1396 = vmul.u32 %v699, 8
    %vm1397 = vcmp.lt.s32.totalorder %v682, %v1396
    %vm1398 = vcmp.lt.s32.totalorder %v683, %v1396
    %vm1399 = vcmp.lt.s32.totalorder %v684, %v1396
    %vm1400 = vcmp.lt.s32.totalorder %v685, %v1396
    %vm1401 = vmand %vm1392, %vm1397
    %vm1402 = vmand %vm1393, %vm1398
    %vm1403 = vmand %vm1394, %vm1399
    %vm1404 = vmand %vm1395, %vm1400
    %v1405 = vsel %vm1401, 1, 0
    %v1406 = vsel %vm1402, 1, 0
    %v1407 = vsel %vm1403, 1, 0
    %v1408 = vsel %vm1404, 1, 0
    %v1409 = vcvt.s32.f32 %v1405
    %v1410 = vcvt.s32.f32 %v1406
    %v1411 = vcvt.s32.f32 %v1407
    %v1412 = vcvt.s32.f32 %v1408
    %v1413 = vmul.u32 %v682, 8
    %vm1414 = vcmp.ge.s32.totalorder %v495, %v1413
    %v1415 = vmul.u32 %v735, 8
    %vm1416 = vcmp.lt.s32.totalorder %v495, %v1415
    %vm1417 = vmand %vm1414, %vm1416
    %v1418 = vsel %vm1417, 1, 0
    %v1419 = vcvt.s32.f32 %v1418
    %v1421 = vsel %vm325, %v1388, 0
    %v1424 = vsel %vm325, %v1390, 0
    %1426 = vmatprep.subr.mxu0 0.0
    %1427 = vmatpush1.msra.mxu0 0.0
    %1428 = vmatprep.subr.mxu0 0.0
    %1429 = vmatpush1.msra.mxu0 0.0
    %1430 = vmatprep.subr.mxu0 0.0
    %1431 = vmatpush1.msra.mxu0 0.0
    %1432 = vmatprep.subr.mxu0 0.0
    %1433 = vmatpush1.msra.mxu0 0.0
    %1434 = vmatprep.subr.mxu0 0.0
    %1435 = vmatpush1.msra.mxu0 0.0
    %1436 = vmatprep.subr.mxu0 0.0
    %1437 = vmatpush1.msra.mxu0 0.0
    %1438 = vmatprep.subr.mxu0 0.0
    %1439 = vmatpush1.msra.mxu0 0.0
    %1440 = vmatprep.subr.mxu0 0.0
    %1441 = vmatpush1.msra.mxu0 0.0
    %1442 = vmatprep.subr.mxu0 0.0
    %1443 = vmatpush1.msra.mxu0 0.0
    %1444 = vmatprep.subr.mxu0 0.0
    %1445 = vmatpush1.msra.mxu0 0.0
    %1446 = vmatprep.subr.mxu0 0.0
    %1447 = vmatpush1.msra.mxu0 0.0
    %1448 = vmatprep.subr.mxu0 0.0
    %1449 = vmatpush1.msra.mxu0 0.0
    %1450 = vmatprep.subr.mxu0 0.0
    %1451 = vmatpush1.msra.mxu0 %v1412
    %1452 = vmatprep.subr.mxu0 0.0
    %1453 = vmatpush1.msra.mxu0 %v1411
    %1454 = vmatprep.subr.mxu0 0.0
    %1455 = vmatpush1.msra.mxu0 %v1410
    %1456 = vmatprep.subr.mxu0 0.0
    %1457 = vmatpush1.msra.mxu0 %v1409
    %1458 = vmatprep.subr.mxu0 0.0
    %1459 = vmatpush2.msra.mxu0 0.0
    %1460 = vmatprep.subr.mxu0 0.0
    %1461 = vmatpush2.msra.mxu0 0.0
    %1462 = vmatprep.subr.mxu0 0.0
    %1463 = vmatpush2.msra.mxu0 0.0
    %1464 = vmatprep.subr.mxu0 0.0
    %1465 = vmatpush2.msra.mxu0 0.0
    %1466 = vmatprep.subr.mxu0 0.0
    %1467 = vmatpush2.msra.mxu0 0.0
    %1468 = vmatprep.subr.mxu0 0.0
    %1469 = vmatpush2.msra.mxu0 0.0
    %1470 = vmatprep.subr.mxu0 0.0
    %1471 = vmatpush2.msra.mxu0 0.0
    %1472 = vmatprep.subr.mxu0 0.0
    %1473 = vmatpush2.msra.mxu0 0.0
    %1474 = vmatprep.subr.mxu0 0.0
    %1475 = vmatpush2.msra.mxu0 0.0
    %1476 = vmatprep.subr.mxu0 0.0
    %1477 = vmatpush2.msra.mxu0 0.0
    %1478 = vmatprep.subr.mxu0 0.0
    %1479 = vmatpush2.msra.mxu0 0.0
    %1480 = vmatprep.subr.mxu0 0.0
    %1481 = vmatpush2.msra.mxu0 0.0
    %1482 = vmatprep.subr.mxu0 0.0
    %1483 = vmatpush2.msra.mxu0 0.0
    %1484 = vmatprep.subr.mxu0 0.0
    %1485 = vmatpush2.msra.mxu0 0.0
    %1486 = vmatprep.subr.mxu0 0.0
    %1487 = vmatpush2.msra.mxu0 0.0
    %1488 = vmatprep.subr.mxu0 0.0
    %1489 = vmatpush2.msra.mxu0 0.0
    %1490 = vmatprep.mubr.f32.mxu0 0.0
    %1491 = vmatmul.mubr.f32.gmra.mxu0 %v1421
    %v1492 = vpop.f32.mrf.mxu0
    %v1493 = vadd.f32 0.0, %v1492
    %v1494 = vpop.f32.mrf.mxu0
    %1495 = vmatprep.mubr.f32.mxu0 0.0
    %1496 = vmatmul.mubr.f32.gmra.mxu0 %v1424
    %v1497 = vpop.f32.mrf.mxu0
    %v1498 = vadd.f32 0.0, %v1497
    %v1499 = vpop.f32.mrf.mxu0
    %1500 = vdwg.mxu0
    %v1501 = vrcp.pop %v1493
    %v1502 = vrcp.pop %v1498
    %v1504 = vsel %vm824, %v1501, 0
    %v1507 = vsel %vm824, %v1502, 0
    %v1510 = vsel %vm831, %v1419, 0
    %1512 = vmatprep.subr.mxu0 0.0
    %1513 = vmatpush1.msra.mxu0 0.0
    %1514 = vmatprep.subr.mxu0 0.0
    %1515 = vmatpush1.msra.mxu0 0.0
    %1516 = vmatprep.subr.mxu0 0.0
    %1517 = vmatpush1.msra.mxu0 0.0
    %1518 = vmatprep.subr.mxu0 0.0
    %1519 = vmatpush1.msra.mxu0 0.0
    %1520 = vmatprep.subr.mxu0 0.0
    %1521 = vmatpush1.msra.mxu0 0.0
    %1522 = vmatprep.subr.mxu0 0.0
    %1523 = vmatpush1.msra.mxu0 0.0
    %1524 = vmatprep.subr.mxu0 0.0
    %1525 = vmatpush1.msra.mxu0 0.0
    %1526 = vmatprep.subr.mxu0 0.0
    %1527 = vmatpush1.msra.mxu0 0.0
    %1528 = vmatprep.subr.mxu0 0.0
    %1529 = vmatpush1.msra.mxu0 0.0
    %1530 = vmatprep.subr.mxu0 0.0
    %1531 = vmatpush1.msra.mxu0 0.0
    %1532 = vmatprep.subr.mxu0 0.0
    %1533 = vmatpush1.msra.mxu0 0.0
    %1534 = vmatprep.subr.mxu0 0.0
    %1535 = vmatpush1.msra.mxu0 0.0
    %1536 = vmatprep.subr.mxu0 0.0
    %1537 = vmatpush1.msra.mxu0 0.0
    %1538 = vmatprep.subr.mxu0 0.0
    %1539 = vmatpush1.msra.mxu0 0.0
    %1540 = vmatprep.subr.mxu0 0.0
    %1541 = vmatpush1.msra.mxu0 0.0
    %1542 = vmatprep.subr.mxu0 0.0
    %1543 = vmatpush1.msra.mxu0 %v1510
    %1544 = vmatprep.subr.mxu0 0.0
    %1545 = vmatpush2.msra.mxu0 0.0
    %1546 = vmatprep.subr.mxu0 0.0
    %1547 = vmatpush2.msra.mxu0 0.0
    %1548 = vmatprep.subr.mxu0 0.0
    %1549 = vmatpush2.msra.mxu0 0.0
    %1550 = vmatprep.subr.mxu0 0.0
    %1551 = vmatpush2.msra.mxu0 0.0
    %1552 = vmatprep.subr.mxu0 0.0
    %1553 = vmatpush2.msra.mxu0 0.0
    %1554 = vmatprep.subr.mxu0 0.0
    %1555 = vmatpush2.msra.mxu0 0.0
    %1556 = vmatprep.subr.mxu0 0.0
    %1557 = vmatpush2.msra.mxu0 0.0
    %1558 = vmatprep.subr.mxu0 0.0
    %1559 = vmatpush2.msra.mxu0 0.0
    %1560 = vmatprep.subr.mxu0 0.0
    %1561 = vmatpush2.msra.mxu0 0.0
    %1562 = vmatprep.subr.mxu0 0.0
    %1563 = vmatpush2.msra.mxu0 0.0
    %1564 = vmatprep.subr.mxu0 0.0
    %1565 = vmatpush2.msra.mxu0 0.0
    %1566 = vmatprep.subr.mxu0 0.0
    %1567 = vmatpush2.msra.mxu0 0.0
    %1568 = vmatprep.subr.mxu0 0.0
    %1569 = vmatpush2.msra.mxu0 0.0
    %1570 = vmatprep.subr.mxu0 0.0
    %1571 = vmatpush2.msra.mxu0 0.0
    %1572 = vmatprep.subr.mxu0 0.0
    %1573 = vmatpush2.msra.mxu0 0.0
    %1574 = vmatprep.subr.mxu0 0.0
    %1575 = vmatpush2.msra.mxu0 0.0
    %1576 = vmatprep.mubr.f32.mxu0 0.0
    %1577 = vmatmul.mubr.f32.gmra.mxu0 %v1504
    %v1578 = vpop.f32.mrf.mxu0
    %v1579 = vadd.f32 0.0, %v1578
    %v1580 = vpop.f32.mrf.mxu0
    %1581 = vmatprep.mubr.f32.mxu0 0.0
    %1582 = vmatmul.mubr.f32.gmra.mxu0 %v1507
    %v1583 = vpop.f32.mrf.mxu0
    %v1584 = vadd.f32 0.0, %v1583
    %v1585 = vpop.f32.mrf.mxu0
    %1586 = vdwg.mxu0
    %v1587 = vmul.f32 %v1388, %v1579
    %v1588 = vmul.f32 %v1390, %v1584
    %v1589 = vpack.c.bf16 %v1587, %v1587
    %v1590 = vpack.c.bf16 %v1588, %v1588
    %v1591 = vpack.c.bf16 %v1268, %v1267
    %v1592 = vpack.c.bf16 %v1270, %v1269
    %v1593 = vpack.c.bf16 %v1272, %v1271
    %v1594 = vpack.c.bf16 %v1274, %v1273
    %v1596 = vsel %vm325, %v1589, 0
    %1598 = vmatprep.subr.bf16.mxu0 0
    %1599 = vmatpush1.bf16.msra.mxu0 0
    %1600 = vmatprep.subr.bf16.mxu0 0
    %1601 = vmatpush1.bf16.msra.mxu0 0
    %1602 = vmatprep.subr.bf16.mxu0 0
    %1603 = vmatpush1.bf16.msra.mxu0 0
    %1604 = vmatprep.subr.bf16.mxu0 0
    %1605 = vmatpush1.bf16.msra.mxu0 0
    %1606 = vmatprep.subr.bf16.mxu0 0
    %1607 = vmatpush1.bf16.msra.mxu0 0
    %1608 = vmatprep.subr.bf16.mxu0 0
    %1609 = vmatpush1.bf16.msra.mxu0 0
    %1610 = vmatprep.subr.bf16.mxu0 0
    %1611 = vmatpush1.bf16.msra.mxu0 %v1592
    %1612 = vmatprep.subr.bf16.mxu0 0
    %1613 = vmatpush1.bf16.msra.mxu0 %v1591
    %1614 = vmatprep.subr.bf16.mxu0 0
    %1615 = vmatpush2.bf16.msra.mxu0 0
    %1616 = vmatprep.subr.bf16.mxu0 0
    %1617 = vmatpush2.bf16.msra.mxu0 0
    %1618 = vmatprep.subr.bf16.mxu0 0
    %1619 = vmatpush2.bf16.msra.mxu0 0
    %1620 = vmatprep.subr.bf16.mxu0 0
    %1621 = vmatpush2.bf16.msra.mxu0 0
    %1622 = vmatprep.subr.bf16.mxu0 0
    %1623 = vmatpush2.bf16.msra.mxu0 0
    %1624 = vmatprep.subr.bf16.mxu0 0
    %1625 = vmatpush2.bf16.msra.mxu0 0
    %1626 = vmatprep.subr.bf16.mxu0 0
    %1627 = vmatpush2.bf16.msra.mxu0 0
    %1628 = vmatprep.subr.bf16.mxu0 0
    %1629 = vmatpush2.bf16.msra.mxu0 0
    %1630 = vmatprep.mubr.bf16.mxu0 0
    %1631 = vmatmul.mubr.bf16.gmra.mxu0 %v1596
    %v1632 = vpop.f32.mrf.mxu0
    %v1633 = vadd.f32 0.0, %v1632
    %v1634 = vpop.f32.mrf.mxu0
    %v1635 = vpop.f32.mrf.mxu0
    %v1636 = vpop.f32.mrf.mxu0
    %1637 = vdwg.mxu0
    %v1639 = vsel %vm325, %v1590, 0
    %1641 = vmatprep.subr.bf16.mxu0 0
    %1642 = vmatpush1.bf16.msra.mxu0 0
    %1643 = vmatprep.subr.bf16.mxu0 0
    %1644 = vmatpush1.bf16.msra.mxu0 0
    %1645 = vmatprep.subr.bf16.mxu0 0
    %1646 = vmatpush1.bf16.msra.mxu0 0
    %1647 = vmatprep.subr.bf16.mxu0 0
    %1648 = vmatpush1.bf16.msra.mxu0 0
    %1649 = vmatprep.subr.bf16.mxu0 0
    %1650 = vmatpush1.bf16.msra.mxu0 0
    %1651 = vmatprep.subr.bf16.mxu0 0
    %1652 = vmatpush1.bf16.msra.mxu0 0
    %1653 = vmatprep.subr.bf16.mxu0 0
    %1654 = vmatpush1.bf16.msra.mxu0 %v1594
    %1655 = vmatprep.subr.bf16.mxu0 0
    %1656 = vmatpush1.bf16.msra.mxu0 %v1593
    %1657 = vmatprep.subr.bf16.mxu0 0
    %1658 = vmatpush2.bf16.msra.mxu0 0
    %1659 = vmatprep.subr.bf16.mxu0 0
    %1660 = vmatpush2.bf16.msra.mxu0 0
    %1661 = vmatprep.subr.bf16.mxu0 0
    %1662 = vmatpush2.bf16.msra.mxu0 0
    %1663 = vmatprep.subr.bf16.mxu0 0
    %1664 = vmatpush2.bf16.msra.mxu0 0
    %1665 = vmatprep.subr.bf16.mxu0 0
    %1666 = vmatpush2.bf16.msra.mxu0 0
    %1667 = vmatprep.subr.bf16.mxu0 0
    %1668 = vmatpush2.bf16.msra.mxu0 0
    %1669 = vmatprep.subr.bf16.mxu0 0
    %1670 = vmatpush2.bf16.msra.mxu0 0
    %1671 = vmatprep.subr.bf16.mxu0 0
    %1672 = vmatpush2.bf16.msra.mxu0 0
    %1673 = vmatprep.mubr.bf16.mxu0 0
    %1674 = vmatmul.mubr.bf16.gmra.mxu0 %v1639
    %v1675 = vpop.f32.mrf.mxu0
    %v1676 = vadd.f32 0.0, %v1675
    %v1677 = vpop.f32.mrf.mxu0
    %v1678 = vpop.f32.mrf.mxu0
    %v1679 = vpop.f32.mrf.mxu0
    %1680 = vdwg.mxu0
    %v1681 = vpack.c.bf16 %v1676, %v1633
    %v1682 = vpack.c.bf16 %v284, %v283
    %v1683 = vpack.c.bf16 %v286, %v285
    %v1685 = vlaneseq
    %v1686 = vshrl.u32 %v1685, 7
    %v1687 = vsub.s32 0, %v1686
    %v1688 = vrot.slane %v287, %v1687
    %v1691 = vsel %vm325, %v1681, 0
    %1693 = vmatprep.subr.bf16.mxu0 0
    %1694 = vmatpush1.bf16.msra.mxu0 0
    %1695 = vmatprep.subr.bf16.mxu0 0
    %1696 = vmatpush1.bf16.msra.mxu0 0
    %1697 = vmatprep.subr.bf16.mxu0 0
    %1698 = vmatpush1.bf16.msra.mxu0 0
    %1699 = vmatprep.subr.bf16.mxu0 0
    %1700 = vmatpush1.bf16.msra.mxu0 0
    %1701 = vmatprep.subr.bf16.mxu0 0
    %1702 = vmatpush1.bf16.msra.mxu0 0
    %1703 = vmatprep.subr.bf16.mxu0 0
    %1704 = vmatpush1.bf16.msra.mxu0 0
    %1705 = vmatprep.subr.bf16.mxu0 0
    %1706 = vmatpush1.bf16.msra.mxu0 %v1683
    %1707 = vmatprep.subr.bf16.mxu0 0
    %1708 = vmatpush1.bf16.msra.mxu0 %v1682
    %1709 = vmatprep.subr.bf16.mxu0 0
    %1710 = vmatpush2.bf16.msra.mxu0 0
    %1711 = vmatprep.subr.bf16.mxu0 0
    %1712 = vmatpush2.bf16.msra.mxu0 0
    %1713 = vmatprep.subr.bf16.mxu0 0
    %1714 = vmatpush2.bf16.msra.mxu0 0
    %1715 = vmatprep.subr.bf16.mxu0 0
    %1716 = vmatpush2.bf16.msra.mxu0 0
    %1717 = vmatprep.subr.bf16.mxu0 0
    %1718 = vmatpush2.bf16.msra.mxu0 0
    %1719 = vmatprep.subr.bf16.mxu0 0
    %1720 = vmatpush2.bf16.msra.mxu0 0
    %1721 = vmatprep.subr.bf16.mxu0 0
    %1722 = vmatpush2.bf16.msra.mxu0 0
    %1723 = vmatprep.subr.bf16.mxu0 0
    %1724 = vmatpush2.bf16.msra.mxu0 0
    %1725 = vmatprep.mubr.bf16.mxu0 0
    %1726 = vmatmul.mubr.bf16.gmra.mxu0 %v1691
    %v1727 = vpop.f32.mrf.mxu0
    %v1728 = vadd.f32 %v1688, %v1727
    %v1729 = vpop.f32.mrf.mxu0
    %v1730 = vpop.f32.mrf.mxu0
    %v1731 = vadd.f32 %v1688, %v1730
    %v1732 = vpop.f32.mrf.mxu0
    %1733 = vdwg.mxu0
    %v1734 = vadd.f32 %v1104, %v1728
    %v1735 = vadd.f32 %v1105, %v1731
    %v1736 = vsel %vm325, %v1734, 0.0
    %1737 = vadd.xlane.f32.xlu0 %v1736
    %v1738 = vpop.xlane.xlu0 %1737
    %v1739 = vsel %vm325, %v1735, 0.0
    %1740 = vadd.xlane.f32.xlu0 %v1739
    %v1741 = vpop.xlane.xlu0 %1740
    %v1742 = vmul.f32 %v1738, %v1069
    %v1743 = vmul.f32 %v1741, %v1069
    %v1744 = vsub.f32 %v1734, %v1742
    %v1745 = vsub.f32 %v1735, %v1743
    %v1746 = vmul.f32 %v1744, %v1744
    %v1747 = vmul.f32 %v1745, %v1745
    %v1748 = vsel %vm325, %v1746, 0.0
    %1749 = vadd.xlane.f32.xlu0 %v1748
    %v1750 = vpop.xlane.xlu0 %1749
    %v1751 = vsel %vm325, %v1747, 0.0
    %1752 = vadd.xlane.f32.xlu0 %v1751
    %v1753 = vpop.xlane.xlu0 %1752
    %v1754 = vmul.f32 %v1750, %v1069
    %v1755 = vmul.f32 %v1753, %v1069
    %v1756 = vadd.f32 %v1754, 1e-05
    %v1757 = vadd.f32 %v1755, 1e-05
    %v1758 = vrsqrt.pop %v1756
    %v1759 = vrsqrt.pop %v1757
    %v1760 = vmul.f32 %v1744, %v1758
    %v1761 = vmul.f32 %v1745, %v1759
    %v1763 = vlaneseq
    %v1764 = vshrl.u32 %v1763, 7
    %v1765 = vsub.s32 0, %v1764
    %v1766 = vrot.slane %v312, %v1765
    %v1768 = vmul.f32 %v1760, %v1766
    %v1769 = vmul.f32 %v1761, %v1766
    %v1771 = vlaneseq
    %v1772 = vshrl.u32 %v1771, 7
    %v1773 = vsub.s32 0, %v1772
    %v1774 = vrot.slane %v313, %v1773
    %v1776 = vadd.f32 %v1768, %v1774
    %v1777 = vadd.f32 %v1769, %v1774
    %v1778 = vpack.c.bf16 %v1777, %v1776
    %v1779 = vpack.c.bf16 %v289, %v288
    %v1780 = vpack.c.bf16 %v291, %v290
    %v1782 = vlaneseq
    %v1783 = vshrl.u32 %v1782, 7
    %v1784 = vsub.s32 0, %v1783
    %v1785 = vrot.slane %v292, %v1784
    %v1788 = vsel %vm325, %v1778, 0
    %1790 = vmatprep.subr.bf16.mxu0 0
    %1791 = vmatpush1.bf16.msra.mxu0 0
    %1792 = vmatprep.subr.bf16.mxu0 0
    %1793 = vmatpush1.bf16.msra.mxu0 0
    %1794 = vmatprep.subr.bf16.mxu0 0
    %1795 = vmatpush1.bf16.msra.mxu0 0
    %1796 = vmatprep.subr.bf16.mxu0 0
    %1797 = vmatpush1.bf16.msra.mxu0 0
    %1798 = vmatprep.subr.bf16.mxu0 0
    %1799 = vmatpush1.bf16.msra.mxu0 0
    %1800 = vmatprep.subr.bf16.mxu0 0
    %1801 = vmatpush1.bf16.msra.mxu0 0
    %1802 = vmatprep.subr.bf16.mxu0 0
    %1803 = vmatpush1.bf16.msra.mxu0 %v1780
    %1804 = vmatprep.subr.bf16.mxu0 0
    %1805 = vmatpush1.bf16.msra.mxu0 %v1779
    %1806 = vmatprep.subr.bf16.mxu0 0
    %1807 = vmatpush2.bf16.msra.mxu0 0
    %1808 = vmatprep.subr.bf16.mxu0 0
    %1809 = vmatpush2.bf16.msra.mxu0 0
    %1810 = vmatprep.subr.bf16.mxu0 0
    %1811 = vmatpush2.bf16.msra.mxu0 0
    %1812 = vmatprep.subr.bf16.mxu0 0
    %1813 = vmatpush2.bf16.msra.mxu0 0
    %1814 = vmatprep.subr.bf16.mxu0 0
    %1815 = vmatpush2.bf16.msra.mxu0 0
    %1816 = vmatprep.subr.bf16.mxu0 0
    %1817 = vmatpush2.bf16.msra.mxu0 0
    %1818 = vmatprep.subr.bf16.mxu0 0
    %1819 = vmatpush2.bf16.msra.mxu0 0
    %1820 = vmatprep.subr.bf16.mxu0 0
    %1821 = vmatpush2.bf16.msra.mxu0 0
    %1822 = vmatprep.mubr.bf16.mxu0 0
    %1823 = vmatmul.mubr.bf16.gmra.mxu0 %v1788
    %v1824 = vpop.f32.mrf.mxu0
    %v1825 = vadd.f32 %v1785, %v1824
    %v1826 = vpop.f32.mrf.mxu0
    %v1827 = vpop.f32.mrf.mxu0
    %v1828 = vadd.f32 %v1785, %v1827
    %v1829 = vpop.f32.mrf.mxu0
    %1830 = vdwg.mxu0
    %v1831 = vmul.f32 %v1825, 0.5
    %v1832 = vmul.f32 %v1828, 0.5
    %v1833 = vmul.f32 %v1825, 0.70710677
    %v1834 = vmul.f32 %v1828, 0.70710677
    %v1835 = verf.f32.pop %v1833
    %v1836 = verf.f32.pop %v1834
    %v1837 = vadd.f32 %v1835, 1.0
    %v1838 = vadd.f32 %v1836, 1.0
    %v1839 = vmul.f32 %v1831, %v1837
    %v1840 = vmul.f32 %v1832, %v1838
    %v1841 = vpack.c.bf16 %v1840, %v1839
    %v1842 = vpack.c.bf16 %v294, %v293
    %v1843 = vpack.c.bf16 %v296, %v295
    %v1844 = vpack.c.bf16 %v298, %v297
    %v1845 = vpack.c.bf16 %v300, %v299
    %v1846 = vpack.c.bf16 %v302, %v301
    %v1847 = vpack.c.bf16 %v304, %v303
    %v1848 = vpack.c.bf16 %v306, %v305
    %v1849 = vpack.c.bf16 %v308, %v307
    %v1851 = vlaneseq
    %v1852 = vshrl.u32 %v1851, 7
    %v1853 = vsub.s32 0, %v1852
    %v1854 = vrot.slane %v309, %v1853
    %1856 = vmatprep.subr.bf16.mxu0 0
    %1857 = vmatpush1.bf16.msra.mxu0 %v1849
    %1858 = vmatprep.subr.bf16.mxu0 0
    %1859 = vmatpush1.bf16.msra.mxu0 %v1848
    %1860 = vmatprep.subr.bf16.mxu0 0
    %1861 = vmatpush1.bf16.msra.mxu0 %v1847
    %1862 = vmatprep.subr.bf16.mxu0 0
    %1863 = vmatpush1.bf16.msra.mxu0 %v1846
    %1864 = vmatprep.subr.bf16.mxu0 0
    %1865 = vmatpush1.bf16.msra.mxu0 %v1845
    %1866 = vmatprep.subr.bf16.mxu0 0
    %1867 = vmatpush1.bf16.msra.mxu0 %v1844
    %1868 = vmatprep.subr.bf16.mxu0 0
    %1869 = vmatpush1.bf16.msra.mxu0 %v1843
    %1870 = vmatprep.subr.bf16.mxu0 0
    %1871 = vmatpush1.bf16.msra.mxu0 %v1842
    %1872 = vmatprep.subr.bf16.mxu0 0
    %1873 = vmatpush2.bf16.msra.mxu0 0
    %1874 = vmatprep.subr.bf16.mxu0 0
    %1875 = vmatpush2.bf16.msra.mxu0 0
    %1876 = vmatprep.subr.bf16.mxu0 0
    %1877 = vmatpush2.bf16.msra.mxu0 0
    %1878 = vmatprep.subr.bf16.mxu0 0
    %1879 = vmatpush2.bf16.msra.mxu0 0
    %1880 = vmatprep.subr.bf16.mxu0 0
    %1881 = vmatpush2.bf16.msra.mxu0 0
    %1882 = vmatprep.subr.bf16.mxu0 0
    %1883 = vmatpush2.bf16.msra.mxu0 0
    %1884 = vmatprep.subr.bf16.mxu0 0
    %1885 = vmatpush2.bf16.msra.mxu0 0
    %1886 = vmatprep.subr.bf16.mxu0 0
    %1887 = vmatpush2.bf16.msra.mxu0 0
    %1888 = vmatprep.mubr.bf16.mxu0 0
    %1889 = vmatmul.mubr.bf16.gmra.mxu0 %v1841
    %v1890 = vpop.f32.mrf.mxu0
    %v1891 = vadd.f32 %v1854, %v1890
    %v1892 = vpop.f32.mrf.mxu0
    %v1893 = vpop.f32.mrf.mxu0
    %v1894 = vadd.f32 %v1854, %v1893
    %v1895 = vpop.f32.mrf.mxu0
    %1896 = vdwg.mxu0
    %v1897 = vadd.f32 %v1776, %v1891
    %v1898 = vadd.f32 %v1777, %v1894
    %v1899 = vsel %vm325, %v1897, 0.0
    %1900 = vadd.xlane.f32.xlu0 %v1899
    %v1901 = vpop.xlane.xlu0 %1900
    %v1902 = vsel %vm325, %v1898, 0.0
    %1903 = vadd.xlane.f32.xlu0 %v1902
    %v1904 = vpop.xlane.xlu0 %1903
    %v1905 = vmul.f32 %v1901, %v1069
    %v1906 = vmul.f32 %v1904, %v1069
    %v1907 = vsub.f32 %v1897, %v1905
    %v1908 = vsub.f32 %v1898, %v1906
    %v1909 = vmul.f32 %v1907, %v1907
    %v1910 = vmul.f32 %v1908, %v1908
    %v1911 = vsel %vm325, %v1909, 0.0
    %1912 = vadd.xlane.f32.xlu0 %v1911
    %v1913 = vpop.xlane.xlu0 %1912
    %v1914 = vsel %vm325, %v1910, 0.0
    %1915 = vadd.xlane.f32.xlu0 %v1914
    %v1916 = vpop.xlane.xlu0 %1915
    %v1917 = vmul.f32 %v1913, %v1069
    %v1918 = vmul.f32 %v1916, %v1069
    %v1919 = vadd.f32 %v1917, 1e-05
    %v1920 = vadd.f32 %v1918, 1e-05
    %v1921 = vrsqrt.pop %v1919
    %v1922 = vrsqrt.pop %v1920
    %v1923 = vmul.f32 %v1907, %v1921
    %v1924 = vmul.f32 %v1908, %v1922
    %v1926 = vlaneseq
    %v1927 = vshrl.u32 %v1926, 7
    %v1928 = vsub.s32 0, %v1927
    %v1929 = vrot.slane %v314, %v1928
    %v1931 = vmul.f32 %v1923, %v1929
    %v1932 = vmul.f32 %v1924, %v1929
    %v1934 = vlaneseq
    %v1935 = vshrl.u32 %v1934, 7
    %v1936 = vsub.s32 0, %v1935
    %v1937 = vrot.slane %v315, %v1936
    %v1939 = vadd.f32 %v1931, %v1937
    %v1940 = vadd.f32 %v1932, %v1937
    %1941 = vst.msk [vmem:[#allocation22] sm:$0xff] %vm325, %v1939
    %1942 = vst.msk [vmem:[#allocation22 + $0x8] sm:$0xff] %vm325, %v1940
    // Predicated region
    $region162: #{tpu_custom_call.1} parent=1 // pred_check
      _
    $region163: #{tpu_custom_call.1} parent=1 // pred_check_branch
      %1944 = sbr.rel (0) target = $region165
    $region164: #{tpu_custom_call.1} parent=1 // pred_region
      %s1946 = ssub.s32 256, 256
      %1947 = vsyncadd [#allocation4], %s1946
      %s1948 = sshll.u32 [#allocation22], 4
      %s1949 = int_to_ptr.vmem [resolvable:$true] %s1948
      %1954 = dma.vmem_to_hbm [thread:$0]  %s1949, 256, %s28, [#allocation4], 128, 128, 8
    $region165: #{tpu_custom_call.1} parent=1 // pred_fallthru
      _
    // Predicated region
    $region166: #{tpu_custom_call.1} parent=1 // pred_check
      _
    $region167: #{tpu_custom_call.1} parent=1 // pred_check_branch
      %1956 = sbr.rel (0) target = $region169
    $region168: #{tpu_custom_call.1} parent=1 // pred_region
      %1957 = dma.done [#allocation4], 256
    $region169: #{tpu_custom_call.1} parent=1 // pred_fallthru
      _
    %1958 = vsyncpa [#allocation3], 1
    %1959 = vsyncpa [#allocation6], 1
    %1960 = vsyncpa [#allocation9], 1
    %1961 = vsyncpa [#allocation12], 1
    %1962 = vsyncpa [#allocation15], 1
    %1963 = vsyncpa [#allocation18], 1
    %1964 = vsyncpa [#allocation21], 1
    %1965 = vsyncpa [#allocation4], 1

</llo_original>
